<compile_context>
chip_gen: v7x
topology: tpu7x:2x2x1
jax: 0.10.0
libtpu: 0.0.40
codegen_flags: <defaults>
</compile_context>

<pallas_src>
import functools
import math

import jax
import jax.numpy as jnp
from jax import lax
from jax.experimental import pallas as pl
from jax.experimental.pallas import tpu as pltpu


def _shared_embeddings_kernel(idx_ref, w_ref, o_ref, *, groups: int):
    """Row gather of the pre-folded embedding table, lane-packed output.

    idx_ref: (tr, groups) int32  -- `groups` consecutive batch rows per output row
    w_ref:   (V, D)              -- effective table (shared embed already folded in)
    o_ref:   (tr, groups * D)    -- lane-dense output slab
    """
    idx = idx_ref[...]                                    # (tr, groups)
    w = w_ref[...]                                        # (V, D)
    tr = idx.shape[0]
    num_embed = w.shape[0]

    # Hoisted out of the per-group loop (grid-step invariant shape).
    row_ids = lax.broadcasted_iota(jnp.int32, (tr, num_embed), 1)

    parts = []
    for g in range(groups):
        # One-hot gather on the MXU.  0/1 is exact in the table dtype
        # (bf16 or f32); accumulation stays f32 via preferred_element_type.
        # Out-of-range / negative indices produce an all-zero row (PyTorch's
        # nn.Embedding would raise instead).
        one_hot = (row_ids == idx[:, g:g + 1]).astype(w.dtype)
        parts.append(jnp.dot(one_hot, w, preferred_element_type=jnp.float32))

    out = parts[0] if groups == 1 else jnp.concatenate(parts, axis=-1)
    o_ref[...] = out.astype(o_ref.dtype)                  # single dense store


def _round_up(a: int, m: int) -> int:
    return (a + m - 1) // m * m


def shared_embeddings_forward(X, embed_weight, shared_embed, *,
                              add_shared_embed: bool = False,
                              tile_rows: int = 512):
    """Pallas TPU forward pass of SharedEmbeddings.

    Args:
      X:             (batch,) integer category indices.
      embed_weight:  (num_embed, embed_dim) embedding table (padding row 0).
      shared_embed:  (1, col_dim) shared embedding; col_dim == embed_dim when
                     add_shared_embed else int(embed_dim * frac_shared_embed).
    Returns:
      (batch, embed_dim) array, dtype of embed_weight.
    """
    B = int(X.shape[0])
    V, D = (int(s) for s in embed_weight.shape)
    col_dim = int(shared_embed.shape[1])
    out_dtype = embed_weight.dtype

    # ---- Fold the shared embedding into the table once (per call, not per tile).
    #      Both modes then reduce to a pure row gather:
    #        add:     (W + s)[X]              == W[X] + s
    #        replace: (W with cols<c := s)[X] == W[X] with cols<c overwritten
    if add_shared_embed:
        w_eff = (embed_weight.astype(jnp.float32)
                 + shared_embed.astype(jnp.float32)).astype(out_dtype)
    else:
        w_eff = embed_weight.at[:, :col_dim].set(
            jnp.broadcast_to(shared_embed.astype(out_dtype), (V, col_dim)))

    # ---- Lane packing: pack `g` consecutive batch rows into one output row so
    #      the kernel's output last dim is a multiple of 128 lanes.
    if D < 128 and math.lcm(D, 128) // D <= 32:
        g = math.lcm(D, 128) // D
    else:
        g = 1
    lane_w = g * D

    idx = X.reshape(-1).astype(jnp.int32)
    Bp = _round_up(max(B, 1), g)
    if Bp != B:
        idx = jnp.pad(idx, (0, Bp - B))       # padded rows gather row 0; sliced off
    Rg = Bp // g                              # packed rows
    idx_packed = idx.reshape(Rg, g)

    # ---- Tile selection over packed rows:
    #      * <= ~tile_rows original batch rows per grid step,
    #      * >= 2 grid steps whenever there is enough work (keeps both v7x
    #        TensorCores busy; an extra step costs ~0.35us on 1-TC chips),
    #      * tile is a multiple of 8 sublanes; padding bounded to < 1 tile.
    max_tr = max(8, tile_rows // g)
    steps = max(1, pl.cdiv(Rg, max_tr))
    if steps == 1 and Rg > 8:
        steps = 2
    tr = _round_up(pl.cdiv(Rg, steps), 8)
    steps = pl.cdiv(Rg, tr)
    Rgp = steps * tr
    if Rgp != Rg:
        idx_packed = jnp.pad(idx_packed, ((0, Rgp - Rg), (0, 0)))

    kernel = functools.partial(_shared_embeddings_kernel, groups=g)

    # ---- VMEM budget: raise the scoped limit only when the table + blocks +
    #      in-kernel intermediates would exceed the ~32 MiB default.
    itemsize = jnp.dtype(out_dtype).itemsize
    est = int(1.5 * (2 * V * D * itemsize                          # table buffers
                     + 2 * (tr * 128 * 4 + tr * lane_w * itemsize)  # idx + out blocks
                     + tr * max(V, 128) * 4 + tr * lane_w * 4))     # one-hot + acc
    vmem_limit = None
    if est > 32 * 1024 * 1024:
        vmem_limit = min(64 * 1024 * 1024, _round_up(est, 1 << 20))

    def build(table_pipeline_mode):
        if table_pipeline_mode is None:
            table_spec = pl.BlockSpec((V, D), lambda i: (0, 0))
        else:
            table_spec = pl.BlockSpec((V, D), lambda i: (0, 0),
                                      pipeline_mode=table_pipeline_mode)
        return pl.pallas_call(
            kernel,
            out_shape=jax.ShapeDtypeStruct((Rgp, lane_w), out_dtype),
            grid=(steps,),
            in_specs=[
                pl.BlockSpec((tr, g), lambda i: (i, 0)),   # packed indices
                table_spec,                                 # grid-invariant table
            ],
            out_specs=pl.BlockSpec((tr, lane_w), lambda i: (i, 0)),
            compiler_params=pltpu.CompilerParams(
                dimension_semantics=("parallel",),
                vmem_limit_bytes=vmem_limit,
            ),
        )

    try:
        # Grid-invariant table: single-buffer it (halves its VMEM footprint).
        out_packed = build(pl.Buffered(1))(idx_packed, w_eff)
    except Exception:
        # TODO(synk): Buffered(1) rejected on this jax version; fall back to the
        # default double-buffered table (correctness identical).
        out_packed = build(None)(idx_packed, w_eff)

    # Free row-major un-pack: (Rgp, g*D) -> (Rgp*g, D), then drop padded rows.
    return out_packed.reshape(Rgp * g, D)[:B]


def _reference_forward(X, W, shared, add_shared_embed):
    out = W[X]
    if add_shared_embed:
        out = out + shared
    else:
        out = out.at[:, :shared.shape[1]].set(
            jnp.broadcast_to(shared, (X.shape[0], shared.shape[1])))
    return out


if __name__ == "__main__":
    key = jax.random.PRNGKey(0)
    k_w, k_s1, k_s2, k_x, k_w2, k_x2, k_s3 = jax.random.split(key, 7)

    # Small tabular config (pytorch_tabular defaults): single categorical column.
    num_embed, embed_dim = 32, 16
    frac_shared_embed = 0.25
    col_dim = int(embed_dim * frac_shared_embed)   # = 4
    batch = 8

    # nn.Embedding init, clamped to [-2, 2], row 0 zeroed (padding_idx=0).
    embed_weight = jnp.clip(
        jax.random.normal(k_w, (num_embed, embed_dim), dtype=jnp.float32), -2.0, 2.0)
    embed_weight = embed_weight.at[0].set(0.0)

    shared_replace = jax.random.uniform(k_s1, (1, col_dim), jnp.float32, -1.0, 1.0)
    shared_add = jax.random.uniform(k_s2, (1, embed_dim), jnp.float32, -1.0, 1.0)
    X = jax.random.randint(k_x, (batch,), 0, num_embed, dtype=jnp.int32)

    # Mode 1: add_shared_embed=False (overwrite first col_dim columns).
    y0 = shared_embeddings_forward(X, embed_weight, shared_replace,
                                   add_shared_embed=False)
    # Mode 2: add_shared_embed=True (broadcast add of shared row).
    y1 = shared_embeddings_forward(X, embed_weight, shared_add,
                                   add_shared_embed=True)
    jax.block_until_ready((y0, y1))

    y0_ref = _reference_forward(X, embed_weight, shared_replace, False)
    y1_ref = _reference_forward(X, embed_weight, shared_add, True)

    assert y0.shape == (batch, embed_dim) and y0.dtype == embed_weight.dtype
    assert y1.shape == (batch, embed_dim) and y1.dtype == embed_weight.dtype
    assert jnp.allclose(y0, y0_ref, atol=1e-6, rtol=1e-6)
    assert jnp.allclose(y1, y1_ref, atol=1e-6, rtol=1e-6)

    # Second config exercising the multi-step grid + batch/row-pack padding path.
    V2, B2 = 96, 333
    W2 = jnp.clip(jax.random.normal(k_w2, (V2, embed_dim), jnp.float32), -2.0, 2.0)
    W2 = W2.at[0].set(0.0)
    S2 = jax.random.uniform(k_s3, (1, col_dim), jnp.float32, -1.0, 1.0)
    X2 = jax.random.randint(k_x2, (B2,), 0, V2, dtype=jnp.int32)
    y2 = shared_embeddings_forward(X2, W2, S2, add_shared_embed=False,
                                   tile_rows=128)
    jax.block_until_ready(y2)
    y2_ref = _reference_forward(X2, W2, S2, False)
    assert y2.shape == (B2, embed_dim)
    assert jnp.allclose(y2, y2_ref, atol=1e-6, rtol=1e-6)

    print("KERNEL_OK")
</pallas_src>

<mosaic_0001>
module attributes {stable_mosaic.version = 11 : i64} {
  func.func @_shared_embeddings_kernel(%arg0: i32, %arg1: memref<8x8xi32, #tpu.memory_space<vmem>>, %arg2: memref<32x16xf32, #tpu.memory_space<vmem>>, %arg3: memref<8x128xf32, #tpu.memory_space<vmem>>) attributes {dimension_semantics = [#tpu.dimension_semantics<parallel>], iteration_bounds = array<i64: 1>, scalar_prefetch = 0 : i64, scratch_operands = 0 : i64, tpu.core_type = #tpu.core_type<tc>, window_params = [{transform_indices = @transform_0, window_bounds = array<i64: 8, 8>}, {pipeline_mode = #tpu.pipeline_mode<synchronous>, transform_indices = @transform_1, window_bounds = array<i64: 32, 16>}, {transform_indices = @transform_2, window_bounds = array<i64: 8, 128>}]} {
    %c0 = arith.constant 0 : index
    %c0_0 = arith.constant 0 : index
    %0 = vector.load %arg1[%c0, %c0_0] : memref<8x8xi32, #tpu.memory_space<vmem>>, vector<8x8xi32>
    %c0_1 = arith.constant 0 : index
    %c0_2 = arith.constant 0 : index
    %1 = vector.load %arg2[%c0_1, %c0_2] : memref<32x16xf32, #tpu.memory_space<vmem>>, vector<32x16xf32>
    %2 = tpu.iota {dimensions = array<i32: 1>} : vector<8x32xi32>
    %3 = vector.extract_strided_slice %0 {offsets = [0, 0], sizes = [8, 1], strides = [1, 1]} : vector<8x8xi32> to vector<8x1xi32>
    %4 = vector.broadcast %3 : vector<8x1xi32> to vector<8x32xi32>
    %5 = arith.cmpi eq, %2, %4 : vector<8x32xi32>
    %6 = arith.extui %5 : vector<8x32xi1> to vector<8x32xi32>
    %7 = arith.sitofp %6 : vector<8x32xi32> to vector<8x32xf32>
    %cst = arith.constant dense<0.000000e+00> : vector<8x16xf32>
    %8 = tpu.matmul %7, %1, %cst {dimension_numbers = #tpu.dot_dimension_numbers<[1], [0], [0], [1], [0, 0, 1, 1], [], []>} : vector<8x32xf32>, vector<32x16xf32>, vector<8x16xf32> -> vector<8x16xf32>
    %9 = vector.extract_strided_slice %0 {offsets = [0, 1], sizes = [8, 1], strides = [1, 1]} : vector<8x8xi32> to vector<8x1xi32>
    %10 = vector.broadcast %9 : vector<8x1xi32> to vector<8x32xi32>
    %11 = arith.cmpi eq, %2, %10 : vector<8x32xi32>
    %12 = arith.extui %11 : vector<8x32xi1> to vector<8x32xi32>
    %13 = arith.sitofp %12 : vector<8x32xi32> to vector<8x32xf32>
    %cst_3 = arith.constant dense<0.000000e+00> : vector<8x16xf32>
    %14 = tpu.matmul %13, %1, %cst_3 {dimension_numbers = #tpu.dot_dimension_numbers<[1], [0], [0], [1], [0, 0, 1, 1], [], []>} : vector<8x32xf32>, vector<32x16xf32>, vector<8x16xf32> -> vector<8x16xf32>
    %15 = vector.extract_strided_slice %0 {offsets = [0, 2], sizes = [8, 1], strides = [1, 1]} : vector<8x8xi32> to vector<8x1xi32>
    %16 = vector.broadcast %15 : vector<8x1xi32> to vector<8x32xi32>
    %17 = arith.cmpi eq, %2, %16 : vector<8x32xi32>
    %18 = arith.extui %17 : vector<8x32xi1> to vector<8x32xi32>
    %19 = arith.sitofp %18 : vector<8x32xi32> to vector<8x32xf32>
    %cst_4 = arith.constant dense<0.000000e+00> : vector<8x16xf32>
    %20 = tpu.matmul %19, %1, %cst_4 {dimension_numbers = #tpu.dot_dimension_numbers<[1], [0], [0], [1], [0, 0, 1, 1], [], []>} : vector<8x32xf32>, vector<32x16xf32>, vector<8x16xf32> -> vector<8x16xf32>
    %21 = vector.extract_strided_slice %0 {offsets = [0, 3], sizes = [8, 1], strides = [1, 1]} : vector<8x8xi32> to vector<8x1xi32>
    %22 = vector.broadcast %21 : vector<8x1xi32> to vector<8x32xi32>
    %23 = arith.cmpi eq, %2, %22 : vector<8x32xi32>
    %24 = arith.extui %23 : vector<8x32xi1> to vector<8x32xi32>
    %25 = arith.sitofp %24 : vector<8x32xi32> to vector<8x32xf32>
    %cst_5 = arith.constant dense<0.000000e+00> : vector<8x16xf32>
    %26 = tpu.matmul %25, %1, %cst_5 {dimension_numbers = #tpu.dot_dimension_numbers<[1], [0], [0], [1], [0, 0, 1, 1], [], []>} : vector<8x32xf32>, vector<32x16xf32>, vector<8x16xf32> -> vector<8x16xf32>
    %27 = vector.extract_strided_slice %0 {offsets = [0, 4], sizes = [8, 1], strides = [1, 1]} : vector<8x8xi32> to vector<8x1xi32>
    %28 = vector.broadcast %27 : vector<8x1xi32> to vector<8x32xi32>
    %29 = arith.cmpi eq, %2, %28 : vector<8x32xi32>
    %30 = arith.extui %29 : vector<8x32xi1> to vector<8x32xi32>
    %31 = arith.sitofp %30 : vector<8x32xi32> to vector<8x32xf32>
    %cst_6 = arith.constant dense<0.000000e+00> : vector<8x16xf32>
    %32 = tpu.matmul %31, %1, %cst_6 {dimension_numbers = #tpu.dot_dimension_numbers<[1], [0], [0], [1], [0, 0, 1, 1], [], []>} : vector<8x32xf32>, vector<32x16xf32>, vector<8x16xf32> -> vector<8x16xf32>
    %33 = vector.extract_strided_slice %0 {offsets = [0, 5], sizes = [8, 1], strides = [1, 1]} : vector<8x8xi32> to vector<8x1xi32>
    %34 = vector.broadcast %33 : vector<8x1xi32> to vector<8x32xi32>
    %35 = arith.cmpi eq, %2, %34 : vector<8x32xi32>
    %36 = arith.extui %35 : vector<8x32xi1> to vector<8x32xi32>
    %37 = arith.sitofp %36 : vector<8x32xi32> to vector<8x32xf32>
    %cst_7 = arith.constant dense<0.000000e+00> : vector<8x16xf32>
    %38 = tpu.matmul %37, %1, %cst_7 {dimension_numbers = #tpu.dot_dimension_numbers<[1], [0], [0], [1], [0, 0, 1, 1], [], []>} : vector<8x32xf32>, vector<32x16xf32>, vector<8x16xf32> -> vector<8x16xf32>
    %39 = vector.extract_strided_slice %0 {offsets = [0, 6], sizes = [8, 1], strides = [1, 1]} : vector<8x8xi32> to vector<8x1xi32>
    %40 = vector.broadcast %39 : vector<8x1xi32> to vector<8x32xi32>
    %41 = arith.cmpi eq, %2, %40 : vector<8x32xi32>
    %42 = arith.extui %41 : vector<8x32xi1> to vector<8x32xi32>
    %43 = arith.sitofp %42 : vector<8x32xi32> to vector<8x32xf32>
    %cst_8 = arith.constant dense<0.000000e+00> : vector<8x16xf32>
    %44 = tpu.matmul %43, %1, %cst_8 {dimension_numbers = #tpu.dot_dimension_numbers<[1], [0], [0], [1], [0, 0, 1, 1], [], []>} : vector<8x32xf32>, vector<32x16xf32>, vector<8x16xf32> -> vector<8x16xf32>
    %45 = vector.extract_strided_slice %0 {offsets = [0, 7], sizes = [8, 1], strides = [1, 1]} : vector<8x8xi32> to vector<8x1xi32>
    %46 = vector.broadcast %45 : vector<8x1xi32> to vector<8x32xi32>
    %47 = arith.cmpi eq, %2, %46 : vector<8x32xi32>
    %48 = arith.extui %47 : vector<8x32xi1> to vector<8x32xi32>
    %49 = arith.sitofp %48 : vector<8x32xi32> to vector<8x32xf32>
    %cst_9 = arith.constant dense<0.000000e+00> : vector<8x16xf32>
    %50 = tpu.matmul %49, %1, %cst_9 {dimension_numbers = #tpu.dot_dimension_numbers<[1], [0], [0], [1], [0, 0, 1, 1], [], []>} : vector<8x32xf32>, vector<32x16xf32>, vector<8x16xf32> -> vector<8x16xf32>
    %51 = tpu.concatenate %8, %14, %20, %26, %32, %38, %44, %50 in 1 : vector<8x16xf32>, vector<8x16xf32>, vector<8x16xf32>, vector<8x16xf32>, vector<8x16xf32>, vector<8x16xf32>, vector<8x16xf32>, vector<8x16xf32> -> vector<8x128xf32>
    %c0_10 = arith.constant 0 : index
    %c0_11 = arith.constant 0 : index
    %52 = vector.load %arg3[%c0_10, %c0_11] : memref<8x128xf32, #tpu.memory_space<vmem>>, vector<8x128xf32>
    tpu.vector_store %arg3[%c0_10, %c0_11], %51 {strides = array<i32>} : memref<8x128xf32, #tpu.memory_space<vmem>>, vector<8x128xf32>,
    return
  }
  func.func @transform_0(%arg0: i32) -> (i32, i32) {
    %c0_i32 = arith.constant 0 : i32
    %c0_i32_0 = arith.constant 0 : i32
    return %arg0, %c0_i32 : i32, i32
  }
  func.func @transform_1(%arg0: i32) -> (i32, i32) {
    %c0_i32 = arith.constant 0 : i32
    %c0_i32_0 = arith.constant 0 : i32
    %c0_i32_1 = arith.constant 0 : i32
    return %c0_i32, %c0_i32_0 : i32, i32
  }
  func.func @transform_2(%arg0: i32) -> (i32, i32) {
    %c0_i32 = arith.constant 0 : i32
    %c0_i32_0 = arith.constant 0 : i32
    return %arg0, %c0_i32 : i32, i32
  }
}

module attributes {stable_mosaic.version = 11 : i64} {
  func.func @_shared_embeddings_kernel(%arg0: i32, %arg1: memref<8x8xi32, #tpu.memory_space<vmem>>, %arg2: memref<32x16xf32, #tpu.memory_space<vmem>>, %arg3: memref<8x128xf32, #tpu.memory_space<vmem>>) attributes {dimension_semantics = [#tpu.dimension_semantics<parallel>], iteration_bounds = array<i64: 1>, scalar_prefetch = 0 : i64, scratch_operands = 0 : i64, tpu.core_type = #tpu.core_type<tc>, window_params = [{transform_indices = @transform_0, window_bounds = array<i64: 8, 8>}, {pipeline_mode = #tpu.pipeline_mode<synchronous>, transform_indices = @transform_1, window_bounds = array<i64: 32, 16>}, {transform_indices = @transform_2, window_bounds = array<i64: 8, 128>}]} {
    %c0 = arith.constant 0 : index
    %c0_0 = arith.constant 0 : index
    %0 = vector.load %arg1[%c0, %c0_0] : memref<8x8xi32, #tpu.memory_space<vmem>>, vector<8x8xi32>
    %c0_1 = arith.constant 0 : index
    %c0_2 = arith.constant 0 : index
    %1 = vector.load %arg2[%c0_1, %c0_2] : memref<32x16xf32, #tpu.memory_space<vmem>>, vector<32x16xf32>
    %2 = tpu.iota {dimensions = array<i32: 1>} : vector<8x32xi32>
    %3 = vector.extract_strided_slice %0 {offsets = [0, 0], sizes = [8, 1], strides = [1, 1]} : vector<8x8xi32> to vector<8x1xi32>
    %4 = vector.broadcast %3 : vector<8x1xi32> to vector<8x32xi32>
    %5 = arith.cmpi eq, %2, %4 : vector<8x32xi32>
    %6 = arith.extui %5 : vector<8x32xi1> to vector<8x32xi32>
    %7 = arith.sitofp %6 : vector<8x32xi32> to vector<8x32xf32>
    %cst = arith.constant dense<0.000000e+00> : vector<8x16xf32>
    %8 = tpu.matmul %7, %1, %cst {dimension_numbers = #tpu.dot_dimension_numbers<[1], [0], [0], [1], [0, 0, 1, 1], [], []>} : vector<8x32xf32>, vector<32x16xf32>, vector<8x16xf32> -> vector<8x16xf32>
    %9 = vector.extract_strided_slice %0 {offsets = [0, 1], sizes = [8, 1], strides = [1, 1]} : vector<8x8xi32> to vector<8x1xi32>
    %10 = vector.broadcast %9 : vector<8x1xi32> to vector<8x32xi32>
    %11 = arith.cmpi eq, %2, %10 : vector<8x32xi32>
    %12 = arith.extui %11 : vector<8x32xi1> to vector<8x32xi32>
    %13 = arith.sitofp %12 : vector<8x32xi32> to vector<8x32xf32>
    %cst_3 = arith.constant dense<0.000000e+00> : vector<8x16xf32>
    %14 = tpu.matmul %13, %1, %cst_3 {dimension_numbers = #tpu.dot_dimension_numbers<[1], [0], [0], [1], [0, 0, 1, 1], [], []>} : vector<8x32xf32>, vector<32x16xf32>, vector<8x16xf32> -> vector<8x16xf32>
    %15 = vector.extract_strided_slice %0 {offsets = [0, 2], sizes = [8, 1], strides = [1, 1]} : vector<8x8xi32> to vector<8x1xi32>
    %16 = vector.broadcast %15 : vector<8x1xi32> to vector<8x32xi32>
    %17 = arith.cmpi eq, %2, %16 : vector<8x32xi32>
    %18 = arith.extui %17 : vector<8x32xi1> to vector<8x32xi32>
    %19 = arith.sitofp %18 : vector<8x32xi32> to vector<8x32xf32>
    %cst_4 = arith.constant dense<0.000000e+00> : vector<8x16xf32>
    %20 = tpu.matmul %19, %1, %cst_4 {dimension_numbers = #tpu.dot_dimension_numbers<[1], [0], [0], [1], [0, 0, 1, 1], [], []>} : vector<8x32xf32>, vector<32x16xf32>, vector<8x16xf32> -> vector<8x16xf32>
    %21 = vector.extract_strided_slice %0 {offsets = [0, 3], sizes = [8, 1], strides = [1, 1]} : vector<8x8xi32> to vector<8x1xi32>
    %22 = vector.broadcast %21 : vector<8x1xi32> to vector<8x32xi32>
    %23 = arith.cmpi eq, %2, %22 : vector<8x32xi32>
    %24 = arith.extui %23 : vector<8x32xi1> to vector<8x32xi32>
    %25 = arith.sitofp %24 : vector<8x32xi32> to vector<8x32xf32>
    %cst_5 = arith.constant dense<0.000000e+00> : vector<8x16xf32>
    %26 = tpu.matmul %25, %1, %cst_5 {dimension_numbers = #tpu.dot_dimension_numbers<[1], [0], [0], [1], [0, 0, 1, 1], [], []>} : vector<8x32xf32>, vector<32x16xf32>, vector<8x16xf32> -> vector<8x16xf32>
    %27 = vector.extract_strided_slice %0 {offsets = [0, 4], sizes = [8, 1], strides = [1, 1]} : vector<8x8xi32> to vector<8x1xi32>
    %28 = vector.broadcast %27 : vector<8x1xi32> to vector<8x32xi32>
    %29 = arith.cmpi eq, %2, %28 : vector<8x32xi32>
    %30 = arith.extui %29 : vector<8x32xi1> to vector<8x32xi32>
    %31 = arith.sitofp %30 : vector<8x32xi32> to vector<8x32xf32>
    %cst_6 = arith.constant dense<0.000000e+00> : vector<8x16xf32>
    %32 = tpu.matmul %31, %1, %cst_6 {dimension_numbers = #tpu.dot_dimension_numbers<[1], [0], [0], [1], [0, 0, 1, 1], [], []>} : vector<8x32xf32>, vector<32x16xf32>, vector<8x16xf32> -> vector<8x16xf32>
    %33 = vector.extract_strided_slice %0 {offsets = [0, 5], sizes = [8, 1], strides = [1, 1]} : vector<8x8xi32> to vector<8x1xi32>
    %34 = vector.broadcast %33 : vector<8x1xi32> to vector<8x32xi32>
    %35 = arith.cmpi eq, %2, %34 : vector<8x32xi32>
    %36 = arith.extui %35 : vector<8x32xi1> to vector<8x32xi32>
    %37 = arith.sitofp %36 : vector<8x32xi32> to vector<8x32xf32>
    %cst_7 = arith.constant dense<0.000000e+00> : vector<8x16xf32>
    %38 = tpu.matmul %37, %1, %cst_7 {dimension_numbers = #tpu.dot_dimension_numbers<[1], [0], [0], [1], [0, 0, 1, 1], [], []>} : vector<8x32xf32>, vector<32x16xf32>, vector<8x16xf32> -> vector<8x16xf32>
    %39 = vector.extract_strided_slice %0 {offsets = [0, 6], sizes = [8, 1], strides = [1, 1]} : vector<8x8xi32> to vector<8x1xi32>
    %40 = vector.broadcast %39 : vector<8x1xi32> to vector<8x32xi32>
    %41 = arith.cmpi eq, %2, %40 : vector<8x32xi32>
    %42 = arith.extui %41 : vector<8x32xi1> to vector<8x32xi32>
    %43 = arith.sitofp %42 : vector<8x32xi32> to vector<8x32xf32>
    %cst_8 = arith.constant dense<0.000000e+00> : vector<8x16xf32>
    %44 = tpu.matmul %43, %1, %cst_8 {dimension_numbers = #tpu.dot_dimension_numbers<[1], [0], [0], [1], [0, 0, 1, 1], [], []>} : vector<8x32xf32>, vector<32x16xf32>, vector<8x16xf32> -> vector<8x16xf32>
    %45 = vector.extract_strided_slice %0 {offsets = [0, 7], sizes = [8, 1], strides = [1, 1]} : vector<8x8xi32> to vector<8x1xi32>
    %46 = vector.broadcast %45 : vector<8x1xi32> to vector<8x32xi32>
    %47 = arith.cmpi eq, %2, %46 : vector<8x32xi32>
    %48 = arith.extui %47 : vector<8x32xi1> to vector<8x32xi32>
    %49 = arith.sitofp %48 : vector<8x32xi32> to vector<8x32xf32>
    %cst_9 = arith.constant dense<0.000000e+00> : vector<8x16xf32>
    %50 = tpu.matmul %49, %1, %cst_9 {dimension_numbers = #tpu.dot_dimension_numbers<[1], [0], [0], [1], [0, 0, 1, 1], [], []>} : vector<8x32xf32>, vector<32x16xf32>, vector<8x16xf32> -> vector<8x16xf32>
    %51 = tpu.concatenate %8, %14, %20, %26, %32, %38, %44, %50 in 1 : vector<8x16xf32>, vector<8x16xf32>, vector<8x16xf32>, vector<8x16xf32>, vector<8x16xf32>, vector<8x16xf32>, vector<8x16xf32>, vector<8x16xf32> -> vector<8x128xf32>
    %c0_10 = arith.constant 0 : index
    %c0_11 = arith.constant 0 : index
    %52 = vector.load %arg3[%c0_10, %c0_11] : memref<8x128xf32, #tpu.memory_space<vmem>>, vector<8x128xf32>
    tpu.vector_store %arg3[%c0_10, %c0_11], %51 {strides = array<i32>} : memref<8x128xf32, #tpu.memory_space<vmem>>, vector<8x128xf32>,
    return
  }
  func.func @transform_0(%arg0: i32) -> (i32, i32) {
    %c0_i32 = arith.constant 0 : i32
    %c0_i32_0 = arith.constant 0 : i32
    return %arg0, %c0_i32 : i32, i32
  }
  func.func @transform_1(%arg0: i32) -> (i32, i32) {
    %c0_i32 = arith.constant 0 : i32
    %c0_i32_0 = arith.constant 0 : i32
    %c0_i32_1 = arith.constant 0 : i32
    return %c0_i32, %c0_i32_0 : i32, i32
  }
  func.func @transform_2(%arg0: i32) -> (i32, i32) {
    %c0_i32 = arith.constant 0 : i32
    %c0_i32_0 = arith.constant 0 : i32
    return %arg0, %c0_i32 : i32, i32
  }
}

</mosaic_0001>

<llo_original>
// kernel: tpu_custom_call.1
$region0: #{tpu_custom_call.1}
  #allocation0 [shape = 'u32[]', space=smem, size = 0x4, offset = 0x4, fixed_abs, tag = 'smem constant byte address 0x4 - core index']
  #allocation1 [shape = 'u32[144,128]{1,0:T(1,128)}', space=vmem, size = 0x12000, scoped, tag = 'internal scratch']
  %s0 = inlined_call_operand.vmem [shape: s32[8,8], index: 0, kind: input, shape index: {}]
  %s1 = inlined_call_operand.vmem [shape: f32[32,16], index: 1, kind: input, shape index: {}]
  %s2 = inlined_call_operand.hbm [shape: f32[8,128], index: 2, kind: output, shape index: {}]
  %s3 = sld [smem:[#allocation0]]
  $region18: #{tpu_custom_call.1} parent=0
    _
  %s5 = ssub.s32 1, %s3
  %s6 = scalar_select 0, %s5, %s3
  $region1: #{tpu_custom_call.1} parent=0
    #allocation2 [shape = 'u8[4096]{0}', space=vmem, size = 0x1000, scoped, tag = 'output window, operand 0, single buffered']
    #allocation3 [shape = 's32[1]{0}', space=sflag, size = 0x4, scoped, tag = 'scoped memory for tpu_custom_call.1']
    %7 = vsyncpa [#allocation3], 0
    // Predicated region
    $region2: #{tpu_custom_call.1} parent=1 // pred_check
      _
    $region3: #{tpu_custom_call.1} parent=1 // pred_check_branch
      %9 = sbr.rel (0) target = $region5
    $region4: #{tpu_custom_call.1} parent=1 // pred_region
      _
    $region5: #{tpu_custom_call.1} parent=1 // pred_fallthru
      _
    // Predicated region
    $region6: #{tpu_custom_call.1} parent=1 // pred_check
      _
    $region7: #{tpu_custom_call.1} parent=1 // pred_check_branch
      %11 = sbr.rel (0) target = $region9
    $region8: #{tpu_custom_call.1} parent=1 // pred_region
      _
    $region9: #{tpu_custom_call.1} parent=1 // pred_fallthru
      _
    %v12 = vld [vmem:[%s0] sm:$0xff]
    %v13 = vld [vmem:[%s1] sm:$0xff]
    %v14 = vld [vmem:[%s1 + $0x8] sm:$0xff]
    %v15 = vld [vmem:[%s1 + $0x10] sm:$0xff]
    %v16 = vld [vmem:[%s1 + $0x18] sm:$0xff]
    %v17 = vlaneseq
    %v18 = vand.u32 %v17, 127
    %19 = vset.pattern.permute.xlu0 0
    %20 = vperm.xlu0 %19, %v12
    %v21 = vpop.permute.xlu0 %20
    %vm22 = vcmp.eq.s32.totalorder %v18, %v21
    %v23 = vsel %vm22, 1, 0
    %v24 = vcvt.s32.f32 %v23
    %vm25 = vcmask 261120
    %v27 = vsel %vm25, %v24, 0
    %29 = vmatprep.subr.mxu0 0.0
    %30 = vmatpush1.msra.mxu0 %v13
    %31 = vmatprep.subr.mxu0 0.0
    %32 = vmatpush1.msra.mxu0 %v14
    %33 = vmatprep.subr.mxu0 0.0
    %34 = vmatpush1.msra.mxu0 %v15
    %35 = vmatprep.subr.mxu0 0.0
    %36 = vmatpush1.msra.mxu0 %v16
    %37 = vmatprep.subr.mxu0 0.0
    %38 = vmatpush1.msra.mxu0 0.0
    %39 = vmatprep.subr.mxu0 0.0
    %40 = vmatpush1.msra.mxu0 0.0
    %41 = vmatprep.subr.mxu0 0.0
    %42 = vmatpush1.msra.mxu0 0.0
    %43 = vmatprep.subr.mxu0 0.0
    %44 = vmatpush1.msra.mxu0 0.0
    %45 = vmatprep.subr.mxu0 0.0
    %46 = vmatpush1.msra.mxu0 0.0
    %47 = vmatprep.subr.mxu0 0.0
    %48 = vmatpush1.msra.mxu0 0.0
    %49 = vmatprep.subr.mxu0 0.0
    %50 = vmatpush1.msra.mxu0 0.0
    %51 = vmatprep.subr.mxu0 0.0
    %52 = vmatpush1.msra.mxu0 0.0
    %53 = vmatprep.subr.mxu0 0.0
    %54 = vmatpush1.msra.mxu0 0.0
    %55 = vmatprep.subr.mxu0 0.0
    %56 = vmatpush1.msra.mxu0 0.0
    %57 = vmatprep.subr.mxu0 0.0
    %58 = vmatpush1.msra.mxu0 0.0
    %59 = vmatprep.subr.mxu0 0.0
    %60 = vmatpush1.msra.mxu0 0.0
    %61 = vmatprep.subr.mxu0 0.0
    %62 = vmatpush1.msra.mxu0 0.0
    %63 = vmatprep.subr.mxu0 0.0
    %64 = vmatpush1.msra.mxu0 0.0
    %65 = vmatprep.subr.mxu0 0.0
    %66 = vmatpush1.msra.mxu0 0.0
    %67 = vmatprep.subr.mxu0 0.0
    %68 = vmatpush1.msra.mxu0 0.0
    %69 = vmatprep.subr.mxu0 0.0
    %70 = vmatpush1.msra.mxu0 0.0
    %71 = vmatprep.subr.mxu0 0.0
    %72 = vmatpush1.msra.mxu0 0.0
    %73 = vmatprep.subr.mxu0 0.0
    %74 = vmatpush1.msra.mxu0 0.0
    %75 = vmatprep.subr.mxu0 0.0
    %76 = vmatpush1.msra.mxu0 0.0
    %77 = vmatprep.subr.mxu0 0.0
    %78 = vmatpush1.msra.mxu0 0.0
    %79 = vmatprep.subr.mxu0 0.0
    %80 = vmatpush1.msra.mxu0 0.0
    %81 = vmatprep.subr.mxu0 0.0
    %82 = vmatpush1.msra.mxu0 0.0
    %83 = vmatprep.subr.mxu0 0.0
    %84 = vmatpush1.msra.mxu0 0.0
    %85 = vmatprep.subr.mxu0 0.0
    %86 = vmatpush1.msra.mxu0 0.0
    %87 = vmatprep.subr.mxu0 0.0
    %88 = vmatpush1.msra.mxu0 0.0
    %89 = vmatprep.subr.mxu0 0.0
    %90 = vmatpush1.msra.mxu0 0.0
    %91 = vmatprep.subr.mxu0 0.0
    %92 = vmatpush1.msra.mxu0 0.0
    %93 = vmatprep.mubr.f32.mxu0 0.0
    %94 = vmatmul.mubr.f32.gmra.mrb[0].mxu0 %v27
    %v95 = vpop.f32.mrb[0].mxu0
    %v96 = vadd.f32 0.0, %v95
    %v97 = vpop.f32.mrb[0].mxu0
    %98 = vdwg.mxu0
    %99 = vset.pattern.permute.xlu0 1
    %100 = vperm.xlu0 %99, %v12
    %v101 = vpop.permute.xlu0 %100
    %vm102 = vcmp.eq.s32.totalorder %v18, %v101
    %v103 = vsel %vm102, 1, 0
    %v104 = vcvt.s32.f32 %v103
    %v106 = vsel %vm25, %v104, 0
    %108 = vmatprep.subr.mxu0 0.0
    %109 = vmatpush1.msra.mxu0 %v13
    %110 = vmatprep.subr.mxu0 0.0
    %111 = vmatpush1.msra.mxu0 %v14
    %112 = vmatprep.subr.mxu0 0.0
    %113 = vmatpush1.msra.mxu0 %v15
    %114 = vmatprep.subr.mxu0 0.0
    %115 = vmatpush1.msra.mxu0 %v16
    %116 = vmatprep.subr.mxu0 0.0
    %117 = vmatpush1.msra.mxu0 0.0
    %118 = vmatprep.subr.mxu0 0.0
    %119 = vmatpush1.msra.mxu0 0.0
    %120 = vmatprep.subr.mxu0 0.0
    %121 = vmatpush1.msra.mxu0 0.0
    %122 = vmatprep.subr.mxu0 0.0
    %123 = vmatpush1.msra.mxu0 0.0
    %124 = vmatprep.subr.mxu0 0.0
    %125 = vmatpush1.msra.mxu0 0.0
    %126 = vmatprep.subr.mxu0 0.0
    %127 = vmatpush1.msra.mxu0 0.0
    %128 = vmatprep.subr.mxu0 0.0
    %129 = vmatpush1.msra.mxu0 0.0
    %130 = vmatprep.subr.mxu0 0.0
    %131 = vmatpush1.msra.mxu0 0.0
    %132 = vmatprep.subr.mxu0 0.0
    %133 = vmatpush1.msra.mxu0 0.0
    %134 = vmatprep.subr.mxu0 0.0
    %135 = vmatpush1.msra.mxu0 0.0
    %136 = vmatprep.subr.mxu0 0.0
    %137 = vmatpush1.msra.mxu0 0.0
    %138 = vmatprep.subr.mxu0 0.0
    %139 = vmatpush1.msra.mxu0 0.0
    %140 = vmatprep.subr.mxu0 0.0
    %141 = vmatpush1.msra.mxu0 0.0
    %142 = vmatprep.subr.mxu0 0.0
    %143 = vmatpush1.msra.mxu0 0.0
    %144 = vmatprep.subr.mxu0 0.0
    %145 = vmatpush1.msra.mxu0 0.0
    %146 = vmatprep.subr.mxu0 0.0
    %147 = vmatpush1.msra.mxu0 0.0
    %148 = vmatprep.subr.mxu0 0.0
    %149 = vmatpush1.msra.mxu0 0.0
    %150 = vmatprep.subr.mxu0 0.0
    %151 = vmatpush1.msra.mxu0 0.0
    %152 = vmatprep.subr.mxu0 0.0
    %153 = vmatpush1.msra.mxu0 0.0
    %154 = vmatprep.subr.mxu0 0.0
    %155 = vmatpush1.msra.mxu0 0.0
    %156 = vmatprep.subr.mxu0 0.0
    %157 = vmatpush1.msra.mxu0 0.0
    %158 = vmatprep.subr.mxu0 0.0
    %159 = vmatpush1.msra.mxu0 0.0
    %160 = vmatprep.subr.mxu0 0.0
    %161 = vmatpush1.msra.mxu0 0.0
    %162 = vmatprep.subr.mxu0 0.0
    %163 = vmatpush1.msra.mxu0 0.0
    %164 = vmatprep.subr.mxu0 0.0
    %165 = vmatpush1.msra.mxu0 0.0
    %166 = vmatprep.subr.mxu0 0.0
    %167 = vmatpush1.msra.mxu0 0.0
    %168 = vmatprep.subr.mxu0 0.0
    %169 = vmatpush1.msra.mxu0 0.0
    %170 = vmatprep.subr.mxu0 0.0
    %171 = vmatpush1.msra.mxu0 0.0
    %172 = vmatprep.mubr.f32.mxu0 0.0
    %173 = vmatmul.mubr.f32.gmra.mrb[0].mxu0 %v106
    %v174 = vpop.f32.mrb[0].mxu0
    %v175 = vadd.f32 0.0, %v174
    %v176 = vpop.f32.mrb[0].mxu0
    %177 = vdwg.mxu0
    %178 = vset.pattern.permute.xlu0 2
    %179 = vperm.xlu0 %178, %v12
    %v180 = vpop.permute.xlu0 %179
    %vm181 = vcmp.eq.s32.totalorder %v18, %v180
    %v182 = vsel %vm181, 1, 0
    %v183 = vcvt.s32.f32 %v182
    %v185 = vsel %vm25, %v183, 0
    %187 = vmatprep.subr.mxu0 0.0
    %188 = vmatpush1.msra.mxu0 %v13
    %189 = vmatprep.subr.mxu0 0.0
    %190 = vmatpush1.msra.mxu0 %v14
    %191 = vmatprep.subr.mxu0 0.0
    %192 = vmatpush1.msra.mxu0 %v15
    %193 = vmatprep.subr.mxu0 0.0
    %194 = vmatpush1.msra.mxu0 %v16
    %195 = vmatprep.subr.mxu0 0.0
    %196 = vmatpush1.msra.mxu0 0.0
    %197 = vmatprep.subr.mxu0 0.0
    %198 = vmatpush1.msra.mxu0 0.0
    %199 = vmatprep.subr.mxu0 0.0
    %200 = vmatpush1.msra.mxu0 0.0
    %201 = vmatprep.subr.mxu0 0.0
    %202 = vmatpush1.msra.mxu0 0.0
    %203 = vmatprep.subr.mxu0 0.0
    %204 = vmatpush1.msra.mxu0 0.0
    %205 = vmatprep.subr.mxu0 0.0
    %206 = vmatpush1.msra.mxu0 0.0
    %207 = vmatprep.subr.mxu0 0.0
    %208 = vmatpush1.msra.mxu0 0.0
    %209 = vmatprep.subr.mxu0 0.0
    %210 = vmatpush1.msra.mxu0 0.0
    %211 = vmatprep.subr.mxu0 0.0
    %212 = vmatpush1.msra.mxu0 0.0
    %213 = vmatprep.subr.mxu0 0.0
    %214 = vmatpush1.msra.mxu0 0.0
    %215 = vmatprep.subr.mxu0 0.0
    %216 = vmatpush1.msra.mxu0 0.0
    %217 = vmatprep.subr.mxu0 0.0
    %218 = vmatpush1.msra.mxu0 0.0
    %219 = vmatprep.subr.mxu0 0.0
    %220 = vmatpush1.msra.mxu0 0.0
    %221 = vmatprep.subr.mxu0 0.0
    %222 = vmatpush1.msra.mxu0 0.0
    %223 = vmatprep.subr.mxu0 0.0
    %224 = vmatpush1.msra.mxu0 0.0
    %225 = vmatprep.subr.mxu0 0.0
    %226 = vmatpush1.msra.mxu0 0.0
    %227 = vmatprep.subr.mxu0 0.0
    %228 = vmatpush1.msra.mxu0 0.0
    %229 = vmatprep.subr.mxu0 0.0
    %230 = vmatpush1.msra.mxu0 0.0
    %231 = vmatprep.subr.mxu0 0.0
    %232 = vmatpush1.msra.mxu0 0.0
    %233 = vmatprep.subr.mxu0 0.0
    %234 = vmatpush1.msra.mxu0 0.0
    %235 = vmatprep.subr.mxu0 0.0
    %236 = vmatpush1.msra.mxu0 0.0
    %237 = vmatprep.subr.mxu0 0.0
    %238 = vmatpush1.msra.mxu0 0.0
    %239 = vmatprep.subr.mxu0 0.0
    %240 = vmatpush1.msra.mxu0 0.0
    %241 = vmatprep.subr.mxu0 0.0
    %242 = vmatpush1.msra.mxu0 0.0
    %243 = vmatprep.subr.mxu0 0.0
    %244 = vmatpush1.msra.mxu0 0.0
    %245 = vmatprep.subr.mxu0 0.0
    %246 = vmatpush1.msra.mxu0 0.0
    %247 = vmatprep.subr.mxu0 0.0
    %248 = vmatpush1.msra.mxu0 0.0
    %249 = vmatprep.subr.mxu0 0.0
    %250 = vmatpush1.msra.mxu0 0.0
    %251 = vmatprep.mubr.f32.mxu0 0.0
    %252 = vmatmul.mubr.f32.gmra.mrb[0].mxu0 %v185
    %v253 = vpop.f32.mrb[0].mxu0
    %v254 = vadd.f32 0.0, %v253
    %v255 = vpop.f32.mrb[0].mxu0
    %256 = vdwg.mxu0
    %257 = vset.pattern.permute.xlu0 3
    %258 = vperm.xlu0 %257, %v12
    %v259 = vpop.permute.xlu0 %258
    %vm260 = vcmp.eq.s32.totalorder %v18, %v259
    %v261 = vsel %vm260, 1, 0
    %v262 = vcvt.s32.f32 %v261
    %v264 = vsel %vm25, %v262, 0
    %266 = vmatprep.subr.mxu0 0.0
    %267 = vmatpush1.msra.mxu0 %v13
    %268 = vmatprep.subr.mxu0 0.0
    %269 = vmatpush1.msra.mxu0 %v14
    %270 = vmatprep.subr.mxu0 0.0
    %271 = vmatpush1.msra.mxu0 %v15
    %272 = vmatprep.subr.mxu0 0.0
    %273 = vmatpush1.msra.mxu0 %v16
    %274 = vmatprep.subr.mxu0 0.0
    %275 = vmatpush1.msra.mxu0 0.0
    %276 = vmatprep.subr.mxu0 0.0
    %277 = vmatpush1.msra.mxu0 0.0
    %278 = vmatprep.subr.mxu0 0.0
    %279 = vmatpush1.msra.mxu0 0.0
    %280 = vmatprep.subr.mxu0 0.0
    %281 = vmatpush1.msra.mxu0 0.0
    %282 = vmatprep.subr.mxu0 0.0
    %283 = vmatpush1.msra.mxu0 0.0
    %284 = vmatprep.subr.mxu0 0.0
    %285 = vmatpush1.msra.mxu0 0.0
    %286 = vmatprep.subr.mxu0 0.0
    %287 = vmatpush1.msra.mxu0 0.0
    %288 = vmatprep.subr.mxu0 0.0
    %289 = vmatpush1.msra.mxu0 0.0
    %290 = vmatprep.subr.mxu0 0.0
    %291 = vmatpush1.msra.mxu0 0.0
    %292 = vmatprep.subr.mxu0 0.0
    %293 = vmatpush1.msra.mxu0 0.0
    %294 = vmatprep.subr.mxu0 0.0
    %295 = vmatpush1.msra.mxu0 0.0
    %296 = vmatprep.subr.mxu0 0.0
    %297 = vmatpush1.msra.mxu0 0.0
    %298 = vmatprep.subr.mxu0 0.0
    %299 = vmatpush1.msra.mxu0 0.0
    %300 = vmatprep.subr.mxu0 0.0
    %301 = vmatpush1.msra.mxu0 0.0
    %302 = vmatprep.subr.mxu0 0.0
    %303 = vmatpush1.msra.mxu0 0.0
    %304 = vmatprep.subr.mxu0 0.0
    %305 = vmatpush1.msra.mxu0 0.0
    %306 = vmatprep.subr.mxu0 0.0
    %307 = vmatpush1.msra.mxu0 0.0
    %308 = vmatprep.subr.mxu0 0.0
    %309 = vmatpush1.msra.mxu0 0.0
    %310 = vmatprep.subr.mxu0 0.0
    %311 = vmatpush1.msra.mxu0 0.0
    %312 = vmatprep.subr.mxu0 0.0
    %313 = vmatpush1.msra.mxu0 0.0
    %314 = vmatprep.subr.mxu0 0.0
    %315 = vmatpush1.msra.mxu0 0.0
    %316 = vmatprep.subr.mxu0 0.0
    %317 = vmatpush1.msra.mxu0 0.0
    %318 = vmatprep.subr.mxu0 0.0
    %319 = vmatpush1.msra.mxu0 0.0
    %320 = vmatprep.subr.mxu0 0.0
    %321 = vmatpush1.msra.mxu0 0.0
    %322 = vmatprep.subr.mxu0 0.0
    %323 = vmatpush1.msra.mxu0 0.0
    %324 = vmatprep.subr.mxu0 0.0
    %325 = vmatpush1.msra.mxu0 0.0
    %326 = vmatprep.subr.mxu0 0.0
    %327 = vmatpush1.msra.mxu0 0.0
    %328 = vmatprep.subr.mxu0 0.0
    %329 = vmatpush1.msra.mxu0 0.0
    %330 = vmatprep.mubr.f32.mxu0 0.0
    %331 = vmatmul.mubr.f32.gmra.mrb[0].mxu0 %v264
    %v332 = vpop.f32.mrb[0].mxu0
    %v333 = vadd.f32 0.0, %v332
    %v334 = vpop.f32.mrb[0].mxu0
    %335 = vdwg.mxu0
    %336 = vset.pattern.permute.xlu0 4
    %337 = vperm.xlu0 %336, %v12
    %v338 = vpop.permute.xlu0 %337
    %vm339 = vcmp.eq.s32.totalorder %v18, %v338
    %v340 = vsel %vm339, 1, 0
    %v341 = vcvt.s32.f32 %v340
    %v343 = vsel %vm25, %v341, 0
    %345 = vmatprep.subr.mxu0 0.0
    %346 = vmatpush1.msra.mxu0 %v13
    %347 = vmatprep.subr.mxu0 0.0
    %348 = vmatpush1.msra.mxu0 %v14
    %349 = vmatprep.subr.mxu0 0.0
    %350 = vmatpush1.msra.mxu0 %v15
    %351 = vmatprep.subr.mxu0 0.0
    %352 = vmatpush1.msra.mxu0 %v16
    %353 = vmatprep.subr.mxu0 0.0
    %354 = vmatpush1.msra.mxu0 0.0
    %355 = vmatprep.subr.mxu0 0.0
    %356 = vmatpush1.msra.mxu0 0.0
    %357 = vmatprep.subr.mxu0 0.0
    %358 = vmatpush1.msra.mxu0 0.0
    %359 = vmatprep.subr.mxu0 0.0
    %360 = vmatpush1.msra.mxu0 0.0
    %361 = vmatprep.subr.mxu0 0.0
    %362 = vmatpush1.msra.mxu0 0.0
    %363 = vmatprep.subr.mxu0 0.0
    %364 = vmatpush1.msra.mxu0 0.0
    %365 = vmatprep.subr.mxu0 0.0
    %366 = vmatpush1.msra.mxu0 0.0
    %367 = vmatprep.subr.mxu0 0.0
    %368 = vmatpush1.msra.mxu0 0.0
    %369 = vmatprep.subr.mxu0 0.0
    %370 = vmatpush1.msra.mxu0 0.0
    %371 = vmatprep.subr.mxu0 0.0
    %372 = vmatpush1.msra.mxu0 0.0
    %373 = vmatprep.subr.mxu0 0.0
    %374 = vmatpush1.msra.mxu0 0.0
    %375 = vmatprep.subr.mxu0 0.0
    %376 = vmatpush1.msra.mxu0 0.0
    %377 = vmatprep.subr.mxu0 0.0
    %378 = vmatpush1.msra.mxu0 0.0
    %379 = vmatprep.subr.mxu0 0.0
    %380 = vmatpush1.msra.mxu0 0.0
    %381 = vmatprep.subr.mxu0 0.0
    %382 = vmatpush1.msra.mxu0 0.0
    %383 = vmatprep.subr.mxu0 0.0
    %384 = vmatpush1.msra.mxu0 0.0
    %385 = vmatprep.subr.mxu0 0.0
    %386 = vmatpush1.msra.mxu0 0.0
    %387 = vmatprep.subr.mxu0 0.0
    %388 = vmatpush1.msra.mxu0 0.0
    %389 = vmatprep.subr.mxu0 0.0
    %390 = vmatpush1.msra.mxu0 0.0
    %391 = vmatprep.subr.mxu0 0.0
    %392 = vmatpush1.msra.mxu0 0.0
    %393 = vmatprep.subr.mxu0 0.0
    %394 = vmatpush1.msra.mxu0 0.0
    %395 = vmatprep.subr.mxu0 0.0
    %396 = vmatpush1.msra.mxu0 0.0
    %397 = vmatprep.subr.mxu0 0.0
    %398 = vmatpush1.msra.mxu0 0.0
    %399 = vmatprep.subr.mxu0 0.0
    %400 = vmatpush1.msra.mxu0 0.0
    %401 = vmatprep.subr.mxu0 0.0
    %402 = vmatpush1.msra.mxu0 0.0
    %403 = vmatprep.subr.mxu0 0.0
    %404 = vmatpush1.msra.mxu0 0.0
    %405 = vmatprep.subr.mxu0 0.0
    %406 = vmatpush1.msra.mxu0 0.0
    %407 = vmatprep.subr.mxu0 0.0
    %408 = vmatpush1.msra.mxu0 0.0
    %409 = vmatprep.mubr.f32.mxu0 0.0
    %410 = vmatmul.mubr.f32.gmra.mrb[0].mxu0 %v343
    %v411 = vpop.f32.mrb[0].mxu0
    %v412 = vadd.f32 0.0, %v411
    %v413 = vpop.f32.mrb[0].mxu0
    %414 = vdwg.mxu0
    %415 = vset.pattern.permute.xlu0 5
    %416 = vperm.xlu0 %415, %v12
    %v417 = vpop.permute.xlu0 %416
    %vm418 = vcmp.eq.s32.totalorder %v18, %v417
    %v419 = vsel %vm418, 1, 0
    %v420 = vcvt.s32.f32 %v419
    %v422 = vsel %vm25, %v420, 0
    %424 = vmatprep.subr.mxu0 0.0
    %425 = vmatpush1.msra.mxu0 %v13
    %426 = vmatprep.subr.mxu0 0.0
    %427 = vmatpush1.msra.mxu0 %v14
    %428 = vmatprep.subr.mxu0 0.0
    %429 = vmatpush1.msra.mxu0 %v15
    %430 = vmatprep.subr.mxu0 0.0
    %431 = vmatpush1.msra.mxu0 %v16
    %432 = vmatprep.subr.mxu0 0.0
    %433 = vmatpush1.msra.mxu0 0.0
    %434 = vmatprep.subr.mxu0 0.0
    %435 = vmatpush1.msra.mxu0 0.0
    %436 = vmatprep.subr.mxu0 0.0
    %437 = vmatpush1.msra.mxu0 0.0
    %438 = vmatprep.subr.mxu0 0.0
    %439 = vmatpush1.msra.mxu0 0.0
    %440 = vmatprep.subr.mxu0 0.0
    %441 = vmatpush1.msra.mxu0 0.0
    %442 = vmatprep.subr.mxu0 0.0
    %443 = vmatpush1.msra.mxu0 0.0
    %444 = vmatprep.subr.mxu0 0.0
    %445 = vmatpush1.msra.mxu0 0.0
    %446 = vmatprep.subr.mxu0 0.0
    %447 = vmatpush1.msra.mxu0 0.0
    %448 = vmatprep.subr.mxu0 0.0
    %449 = vmatpush1.msra.mxu0 0.0
    %450 = vmatprep.subr.mxu0 0.0
    %451 = vmatpush1.msra.mxu0 0.0
    %452 = vmatprep.subr.mxu0 0.0
    %453 = vmatpush1.msra.mxu0 0.0
    %454 = vmatprep.subr.mxu0 0.0
    %455 = vmatpush1.msra.mxu0 0.0
    %456 = vmatprep.subr.mxu0 0.0
    %457 = vmatpush1.msra.mxu0 0.0
    %458 = vmatprep.subr.mxu0 0.0
    %459 = vmatpush1.msra.mxu0 0.0
    %460 = vmatprep.subr.mxu0 0.0
    %461 = vmatpush1.msra.mxu0 0.0
    %462 = vmatprep.subr.mxu0 0.0
    %463 = vmatpush1.msra.mxu0 0.0
    %464 = vmatprep.subr.mxu0 0.0
    %465 = vmatpush1.msra.mxu0 0.0
    %466 = vmatprep.subr.mxu0 0.0
    %467 = vmatpush1.msra.mxu0 0.0
    %468 = vmatprep.subr.mxu0 0.0
    %469 = vmatpush1.msra.mxu0 0.0
    %470 = vmatprep.subr.mxu0 0.0
    %471 = vmatpush1.msra.mxu0 0.0
    %472 = vmatprep.subr.mxu0 0.0
    %473 = vmatpush1.msra.mxu0 0.0
    %474 = vmatprep.subr.mxu0 0.0
    %475 = vmatpush1.msra.mxu0 0.0
    %476 = vmatprep.subr.mxu0 0.0
    %477 = vmatpush1.msra.mxu0 0.0
    %478 = vmatprep.subr.mxu0 0.0
    %479 = vmatpush1.msra.mxu0 0.0
    %480 = vmatprep.subr.mxu0 0.0
    %481 = vmatpush1.msra.mxu0 0.0
    %482 = vmatprep.subr.mxu0 0.0
    %483 = vmatpush1.msra.mxu0 0.0
    %484 = vmatprep.subr.mxu0 0.0
    %485 = vmatpush1.msra.mxu0 0.0
    %486 = vmatprep.subr.mxu0 0.0
    %487 = vmatpush1.msra.mxu0 0.0
    %488 = vmatprep.mubr.f32.mxu0 0.0
    %489 = vmatmul.mubr.f32.gmra.mrb[0].mxu0 %v422
    %v490 = vpop.f32.mrb[0].mxu0
    %v491 = vadd.f32 0.0, %v490
    %v492 = vpop.f32.mrb[0].mxu0
    %493 = vdwg.mxu0
    %494 = vset.pattern.permute.xlu0 6
    %495 = vperm.xlu0 %494, %v12
    %v496 = vpop.permute.xlu0 %495
    %vm497 = vcmp.eq.s32.totalorder %v18, %v496
    %v498 = vsel %vm497, 1, 0
    %v499 = vcvt.s32.f32 %v498
    %v501 = vsel %vm25, %v499, 0
    %503 = vmatprep.subr.mxu0 0.0
    %504 = vmatpush1.msra.mxu0 %v13
    %505 = vmatprep.subr.mxu0 0.0
    %506 = vmatpush1.msra.mxu0 %v14
    %507 = vmatprep.subr.mxu0 0.0
    %508 = vmatpush1.msra.mxu0 %v15
    %509 = vmatprep.subr.mxu0 0.0
    %510 = vmatpush1.msra.mxu0 %v16
    %511 = vmatprep.subr.mxu0 0.0
    %512 = vmatpush1.msra.mxu0 0.0
    %513 = vmatprep.subr.mxu0 0.0
    %514 = vmatpush1.msra.mxu0 0.0
    %515 = vmatprep.subr.mxu0 0.0
    %516 = vmatpush1.msra.mxu0 0.0
    %517 = vmatprep.subr.mxu0 0.0
    %518 = vmatpush1.msra.mxu0 0.0
    %519 = vmatprep.subr.mxu0 0.0
    %520 = vmatpush1.msra.mxu0 0.0
    %521 = vmatprep.subr.mxu0 0.0
    %522 = vmatpush1.msra.mxu0 0.0
    %523 = vmatprep.subr.mxu0 0.0
    %524 = vmatpush1.msra.mxu0 0.0
    %525 = vmatprep.subr.mxu0 0.0
    %526 = vmatpush1.msra.mxu0 0.0
    %527 = vmatprep.subr.mxu0 0.0
    %528 = vmatpush1.msra.mxu0 0.0
    %529 = vmatprep.subr.mxu0 0.0
    %530 = vmatpush1.msra.mxu0 0.0
    %531 = vmatprep.subr.mxu0 0.0
    %532 = vmatpush1.msra.mxu0 0.0
    %533 = vmatprep.subr.mxu0 0.0
    %534 = vmatpush1.msra.mxu0 0.0
    %535 = vmatprep.subr.mxu0 0.0
    %536 = vmatpush1.msra.mxu0 0.0
    %537 = vmatprep.subr.mxu0 0.0
    %538 = vmatpush1.msra.mxu0 0.0
    %539 = vmatprep.subr.mxu0 0.0
    %540 = vmatpush1.msra.mxu0 0.0
    %541 = vmatprep.subr.mxu0 0.0
    %542 = vmatpush1.msra.mxu0 0.0
    %543 = vmatprep.subr.mxu0 0.0
    %544 = vmatpush1.msra.mxu0 0.0
    %545 = vmatprep.subr.mxu0 0.0
    %546 = vmatpush1.msra.mxu0 0.0
    %547 = vmatprep.subr.mxu0 0.0
    %548 = vmatpush1.msra.mxu0 0.0
    %549 = vmatprep.subr.mxu0 0.0
    %550 = vmatpush1.msra.mxu0 0.0
    %551 = vmatprep.subr.mxu0 0.0
    %552 = vmatpush1.msra.mxu0 0.0
    %553 = vmatprep.subr.mxu0 0.0
    %554 = vmatpush1.msra.mxu0 0.0
    %555 = vmatprep.subr.mxu0 0.0
    %556 = vmatpush1.msra.mxu0 0.0
    %557 = vmatprep.subr.mxu0 0.0
    %558 = vmatpush1.msra.mxu0 0.0
    %559 = vmatprep.subr.mxu0 0.0
    %560 = vmatpush1.msra.mxu0 0.0
    %561 = vmatprep.subr.mxu0 0.0
    %562 = vmatpush1.msra.mxu0 0.0
    %563 = vmatprep.subr.mxu0 0.0
    %564 = vmatpush1.msra.mxu0 0.0
    %565 = vmatprep.subr.mxu0 0.0
    %566 = vmatpush1.msra.mxu0 0.0
    %567 = vmatprep.mubr.f32.mxu0 0.0
    %568 = vmatmul.mubr.f32.gmra.mrb[0].mxu0 %v501
    %v569 = vpop.f32.mrb[0].mxu0
    %v570 = vadd.f32 0.0, %v569
    %v571 = vpop.f32.mrb[0].mxu0
    %572 = vdwg.mxu0
    %573 = vset.pattern.permute.xlu0 7
    %574 = vperm.xlu0 %573, %v12
    %v575 = vpop.permute.xlu0 %574
    %vm576 = vcmp.eq.s32.totalorder %v18, %v575
    %v577 = vsel %vm576, 1, 0
    %v578 = vcvt.s32.f32 %v577
    %v580 = vsel %vm25, %v578, 0
    %582 = vmatprep.subr.mxu0 0.0
    %583 = vmatpush1.msra.mxu0 %v13
    %584 = vmatprep.subr.mxu0 0.0
    %585 = vmatpush1.msra.mxu0 %v14
    %586 = vmatprep.subr.mxu0 0.0
    %587 = vmatpush1.msra.mxu0 %v15
    %588 = vmatprep.subr.mxu0 0.0
    %589 = vmatpush1.msra.mxu0 %v16
    %590 = vmatprep.subr.mxu0 0.0
    %591 = vmatpush1.msra.mxu0 0.0
    %592 = vmatprep.subr.mxu0 0.0
    %593 = vmatpush1.msra.mxu0 0.0
    %594 = vmatprep.subr.mxu0 0.0
    %595 = vmatpush1.msra.mxu0 0.0
    %596 = vmatprep.subr.mxu0 0.0
    %597 = vmatpush1.msra.mxu0 0.0
    %598 = vmatprep.subr.mxu0 0.0
    %599 = vmatpush1.msra.mxu0 0.0
    %600 = vmatprep.subr.mxu0 0.0
    %601 = vmatpush1.msra.mxu0 0.0
    %602 = vmatprep.subr.mxu0 0.0
    %603 = vmatpush1.msra.mxu0 0.0
    %604 = vmatprep.subr.mxu0 0.0
    %605 = vmatpush1.msra.mxu0 0.0
    %606 = vmatprep.subr.mxu0 0.0
    %607 = vmatpush1.msra.mxu0 0.0
    %608 = vmatprep.subr.mxu0 0.0
    %609 = vmatpush1.msra.mxu0 0.0
    %610 = vmatprep.subr.mxu0 0.0
    %611 = vmatpush1.msra.mxu0 0.0
    %612 = vmatprep.subr.mxu0 0.0
    %613 = vmatpush1.msra.mxu0 0.0
    %614 = vmatprep.subr.mxu0 0.0
    %615 = vmatpush1.msra.mxu0 0.0
    %616 = vmatprep.subr.mxu0 0.0
    %617 = vmatpush1.msra.mxu0 0.0
    %618 = vmatprep.subr.mxu0 0.0
    %619 = vmatpush1.msra.mxu0 0.0
    %620 = vmatprep.subr.mxu0 0.0
    %621 = vmatpush1.msra.mxu0 0.0
    %622 = vmatprep.subr.mxu0 0.0
    %623 = vmatpush1.msra.mxu0 0.0
    %624 = vmatprep.subr.mxu0 0.0
    %625 = vmatpush1.msra.mxu0 0.0
    %626 = vmatprep.subr.mxu0 0.0
    %627 = vmatpush1.msra.mxu0 0.0
    %628 = vmatprep.subr.mxu0 0.0
    %629 = vmatpush1.msra.mxu0 0.0
    %630 = vmatprep.subr.mxu0 0.0
    %631 = vmatpush1.msra.mxu0 0.0
    %632 = vmatprep.subr.mxu0 0.0
    %633 = vmatpush1.msra.mxu0 0.0
    %634 = vmatprep.subr.mxu0 0.0
    %635 = vmatpush1.msra.mxu0 0.0
    %636 = vmatprep.subr.mxu0 0.0
    %637 = vmatpush1.msra.mxu0 0.0
    %638 = vmatprep.subr.mxu0 0.0
    %639 = vmatpush1.msra.mxu0 0.0
    %640 = vmatprep.subr.mxu0 0.0
    %641 = vmatpush1.msra.mxu0 0.0
    %642 = vmatprep.subr.mxu0 0.0
    %643 = vmatpush1.msra.mxu0 0.0
    %644 = vmatprep.subr.mxu0 0.0
    %645 = vmatpush1.msra.mxu0 0.0
    %646 = vmatprep.mubr.f32.mxu0 0.0
    %647 = vmatmul.mubr.f32.gmra.mrb[0].mxu0 %v580
    %v648 = vpop.f32.mrb[0].mxu0
    %v649 = vadd.f32 0.0, %v648
    %v650 = vpop.f32.mrb[0].mxu0
    %651 = vdwg.mxu0
    %653 = vrot.lane.b32.xlu0 %v175, 16
    %v654 = vpop.permute.xlu0 %653
    %657 = vrot.lane.b32.xlu0 %v254, 32
    %v658 = vpop.permute.xlu0 %657
    %661 = vrot.lane.b32.xlu0 %v333, 48
    %v662 = vpop.permute.xlu0 %661
    %665 = vrot.lane.b32.xlu0 %v412, 64
    %v666 = vpop.permute.xlu0 %665
    %669 = vrot.lane.b32.xlu0 %v491, 80
    %v670 = vpop.permute.xlu0 %669
    %673 = vrot.lane.b32.xlu0 %v570, 96
    %v674 = vpop.permute.xlu0 %673
    %677 = vrot.lane.b32.xlu0 %v649, 112
    %v678 = vpop.permute.xlu0 %677
    %vm680 = vcmask 130048
    %v681 = vsel %vm680, %v96, %v654
    %v682 = vsel %vm25, %v681, %v658
    %vm683 = vcmask 392192
    %v684 = vsel %vm683, %v682, %v662
    %vm685 = vcmask 523264
    %v686 = vsel %vm685, %v684, %v666
    %vm687 = vcmask 654336
    %v688 = vsel %vm687, %v686, %v670
    %vm689 = vcmask 785408
    %v690 = vsel %vm689, %v688, %v674
    %vm691 = vcmask 916480
    %v692 = vsel %vm691, %v690, %v678
    %693 = vst [vmem:[#allocation2] sm:$0xff] %v692
    // Predicated region
    $region10: #{tpu_custom_call.1} parent=1 // pred_check
      _
    $region11: #{tpu_custom_call.1} parent=1 // pred_check_branch
      %695 = sbr.rel (0) target = $region13
    $region12: #{tpu_custom_call.1} parent=1 // pred_region
      %s697 = ssub.s32 128, 128
      %698 = vsyncadd [#allocation3], %s697
      %s700 = sshll.u32 [#allocation2], 4
      %s701 = int_to_ptr.vmem [resolvable:$true] %s700
      %703 = dma.vmem_to_hbm [thread:$0]  %s701, 128, %s2, [#allocation3]
    $region13: #{tpu_custom_call.1} parent=1 // pred_fallthru
      _
    // Predicated region
    $region14: #{tpu_custom_call.1} parent=1 // pred_check
      _
    $region15: #{tpu_custom_call.1} parent=1 // pred_check_branch
      %705 = sbr.rel (0) target = $region17
    $region16: #{tpu_custom_call.1} parent=1 // pred_region
      %706 = dma.done [#allocation3], 128
    $region17: #{tpu_custom_call.1} parent=1 // pred_fallthru
      _
    %707 = vsyncpa [#allocation3], 1

// kernel: tpu_custom_call.1
$region0: #{tpu_custom_call.1}
  #allocation0 [shape = 'u32[]', space=smem, size = 0x4, offset = 0x4, fixed_abs, tag = 'smem constant byte address 0x4 - core index']
  #allocation1 [shape = 'u32[144,128]{1,0:T(1,128)}', space=vmem, size = 0x12000, scoped, tag = 'internal scratch']
  %s0 = inlined_call_operand.vmem [shape: s32[8,8], index: 0, kind: input, shape index: {}]
  %s1 = inlined_call_operand.vmem [shape: f32[32,16], index: 1, kind: input, shape index: {}]
  %s2 = inlined_call_operand.hbm [shape: f32[8,128], index: 2, kind: output, shape index: {}]
  %s3 = sld [smem:[#allocation0]]
  $region18: #{tpu_custom_call.1} parent=0
    _
  %s5 = ssub.s32 1, %s3
  %s6 = scalar_select 0, %s5, %s3
  $region1: #{tpu_custom_call.1} parent=0
    #allocation2 [shape = 'u8[4096]{0}', space=vmem, size = 0x1000, scoped, tag = 'output window, operand 0, single buffered']
    #allocation3 [shape = 's32[1]{0}', space=sflag, size = 0x4, scoped, tag = 'scoped memory for tpu_custom_call.1']
    %7 = vsyncpa [#allocation3], 0
    // Predicated region
    $region2: #{tpu_custom_call.1} parent=1 // pred_check
      _
    $region3: #{tpu_custom_call.1} parent=1 // pred_check_branch
      %9 = sbr.rel (0) target = $region5
    $region4: #{tpu_custom_call.1} parent=1 // pred_region
      _
    $region5: #{tpu_custom_call.1} parent=1 // pred_fallthru
      _
    // Predicated region
    $region6: #{tpu_custom_call.1} parent=1 // pred_check
      _
    $region7: #{tpu_custom_call.1} parent=1 // pred_check_branch
      %11 = sbr.rel (0) target = $region9
    $region8: #{tpu_custom_call.1} parent=1 // pred_region
      _
    $region9: #{tpu_custom_call.1} parent=1 // pred_fallthru
      _
    %v12 = vld [vmem:[%s0] sm:$0xff]
    %v13 = vld [vmem:[%s1] sm:$0xff]
    %v14 = vld [vmem:[%s1 + $0x8] sm:$0xff]
    %v15 = vld [vmem:[%s1 + $0x10] sm:$0xff]
    %v16 = vld [vmem:[%s1 + $0x18] sm:$0xff]
    %v17 = vlaneseq
    %v18 = vand.u32 %v17, 127
    %19 = vset.pattern.permute.xlu0 0
    %20 = vperm.xlu0 %19, %v12
    %v21 = vpop.permute.xlu0 %20
    %vm22 = vcmp.eq.s32.totalorder %v18, %v21
    %v23 = vsel %vm22, 1, 0
    %v24 = vcvt.s32.f32 %v23
    %vm25 = vcmask 261120
    %v27 = vsel %vm25, %v24, 0
    %29 = vmatprep.subr.mxu0 0.0
    %30 = vmatpush1.msra.mxu0 %v13
    %31 = vmatprep.subr.mxu0 0.0
    %32 = vmatpush1.msra.mxu0 %v14
    %33 = vmatprep.subr.mxu0 0.0
    %34 = vmatpush1.msra.mxu0 %v15
    %35 = vmatprep.subr.mxu0 0.0
    %36 = vmatpush1.msra.mxu0 %v16
    %37 = vmatprep.subr.mxu0 0.0
    %38 = vmatpush1.msra.mxu0 0.0
    %39 = vmatprep.subr.mxu0 0.0
    %40 = vmatpush1.msra.mxu0 0.0
    %41 = vmatprep.subr.mxu0 0.0
    %42 = vmatpush1.msra.mxu0 0.0
    %43 = vmatprep.subr.mxu0 0.0
    %44 = vmatpush1.msra.mxu0 0.0
    %45 = vmatprep.subr.mxu0 0.0
    %46 = vmatpush1.msra.mxu0 0.0
    %47 = vmatprep.subr.mxu0 0.0
    %48 = vmatpush1.msra.mxu0 0.0
    %49 = vmatprep.subr.mxu0 0.0
    %50 = vmatpush1.msra.mxu0 0.0
    %51 = vmatprep.subr.mxu0 0.0
    %52 = vmatpush1.msra.mxu0 0.0
    %53 = vmatprep.subr.mxu0 0.0
    %54 = vmatpush1.msra.mxu0 0.0
    %55 = vmatprep.subr.mxu0 0.0
    %56 = vmatpush1.msra.mxu0 0.0
    %57 = vmatprep.subr.mxu0 0.0
    %58 = vmatpush1.msra.mxu0 0.0
    %59 = vmatprep.subr.mxu0 0.0
    %60 = vmatpush1.msra.mxu0 0.0
    %61 = vmatprep.subr.mxu0 0.0
    %62 = vmatpush1.msra.mxu0 0.0
    %63 = vmatprep.subr.mxu0 0.0
    %64 = vmatpush1.msra.mxu0 0.0
    %65 = vmatprep.subr.mxu0 0.0
    %66 = vmatpush1.msra.mxu0 0.0
    %67 = vmatprep.subr.mxu0 0.0
    %68 = vmatpush1.msra.mxu0 0.0
    %69 = vmatprep.subr.mxu0 0.0
    %70 = vmatpush1.msra.mxu0 0.0
    %71 = vmatprep.subr.mxu0 0.0
    %72 = vmatpush1.msra.mxu0 0.0
    %73 = vmatprep.subr.mxu0 0.0
    %74 = vmatpush1.msra.mxu0 0.0
    %75 = vmatprep.subr.mxu0 0.0
    %76 = vmatpush1.msra.mxu0 0.0
    %77 = vmatprep.subr.mxu0 0.0
    %78 = vmatpush1.msra.mxu0 0.0
    %79 = vmatprep.subr.mxu0 0.0
    %80 = vmatpush1.msra.mxu0 0.0
    %81 = vmatprep.subr.mxu0 0.0
    %82 = vmatpush1.msra.mxu0 0.0
    %83 = vmatprep.subr.mxu0 0.0
    %84 = vmatpush1.msra.mxu0 0.0
    %85 = vmatprep.subr.mxu0 0.0
    %86 = vmatpush1.msra.mxu0 0.0
    %87 = vmatprep.subr.mxu0 0.0
    %88 = vmatpush1.msra.mxu0 0.0
    %89 = vmatprep.subr.mxu0 0.0
    %90 = vmatpush1.msra.mxu0 0.0
    %91 = vmatprep.subr.mxu0 0.0
    %92 = vmatpush1.msra.mxu0 0.0
    %93 = vmatprep.mubr.f32.mxu0 0.0
    %94 = vmatmul.mubr.f32.gmra.mrb[0].mxu0 %v27
    %v95 = vpop.f32.mrb[0].mxu0
    %v96 = vadd.f32 0.0, %v95
    %v97 = vpop.f32.mrb[0].mxu0
    %98 = vdwg.mxu0
    %99 = vset.pattern.permute.xlu0 1
    %100 = vperm.xlu0 %99, %v12
    %v101 = vpop.permute.xlu0 %100
    %vm102 = vcmp.eq.s32.totalorder %v18, %v101
    %v103 = vsel %vm102, 1, 0
    %v104 = vcvt.s32.f32 %v103
    %v106 = vsel %vm25, %v104, 0
    %108 = vmatprep.subr.mxu0 0.0
    %109 = vmatpush1.msra.mxu0 %v13
    %110 = vmatprep.subr.mxu0 0.0
    %111 = vmatpush1.msra.mxu0 %v14
    %112 = vmatprep.subr.mxu0 0.0
    %113 = vmatpush1.msra.mxu0 %v15
    %114 = vmatprep.subr.mxu0 0.0
    %115 = vmatpush1.msra.mxu0 %v16
    %116 = vmatprep.subr.mxu0 0.0
    %117 = vmatpush1.msra.mxu0 0.0
    %118 = vmatprep.subr.mxu0 0.0
    %119 = vmatpush1.msra.mxu0 0.0
    %120 = vmatprep.subr.mxu0 0.0
    %121 = vmatpush1.msra.mxu0 0.0
    %122 = vmatprep.subr.mxu0 0.0
    %123 = vmatpush1.msra.mxu0 0.0
    %124 = vmatprep.subr.mxu0 0.0
    %125 = vmatpush1.msra.mxu0 0.0
    %126 = vmatprep.subr.mxu0 0.0
    %127 = vmatpush1.msra.mxu0 0.0
    %128 = vmatprep.subr.mxu0 0.0
    %129 = vmatpush1.msra.mxu0 0.0
    %130 = vmatprep.subr.mxu0 0.0
    %131 = vmatpush1.msra.mxu0 0.0
    %132 = vmatprep.subr.mxu0 0.0
    %133 = vmatpush1.msra.mxu0 0.0
    %134 = vmatprep.subr.mxu0 0.0
    %135 = vmatpush1.msra.mxu0 0.0
    %136 = vmatprep.subr.mxu0 0.0
    %137 = vmatpush1.msra.mxu0 0.0
    %138 = vmatprep.subr.mxu0 0.0
    %139 = vmatpush1.msra.mxu0 0.0
    %140 = vmatprep.subr.mxu0 0.0
    %141 = vmatpush1.msra.mxu0 0.0
    %142 = vmatprep.subr.mxu0 0.0
    %143 = vmatpush1.msra.mxu0 0.0
    %144 = vmatprep.subr.mxu0 0.0
    %145 = vmatpush1.msra.mxu0 0.0
    %146 = vmatprep.subr.mxu0 0.0
    %147 = vmatpush1.msra.mxu0 0.0
    %148 = vmatprep.subr.mxu0 0.0
    %149 = vmatpush1.msra.mxu0 0.0
    %150 = vmatprep.subr.mxu0 0.0
    %151 = vmatpush1.msra.mxu0 0.0
    %152 = vmatprep.subr.mxu0 0.0
    %153 = vmatpush1.msra.mxu0 0.0
    %154 = vmatprep.subr.mxu0 0.0
    %155 = vmatpush1.msra.mxu0 0.0
    %156 = vmatprep.subr.mxu0 0.0
    %157 = vmatpush1.msra.mxu0 0.0
    %158 = vmatprep.subr.mxu0 0.0
    %159 = vmatpush1.msra.mxu0 0.0
    %160 = vmatprep.subr.mxu0 0.0
    %161 = vmatpush1.msra.mxu0 0.0
    %162 = vmatprep.subr.mxu0 0.0
    %163 = vmatpush1.msra.mxu0 0.0
    %164 = vmatprep.subr.mxu0 0.0
    %165 = vmatpush1.msra.mxu0 0.0
    %166 = vmatprep.subr.mxu0 0.0
    %167 = vmatpush1.msra.mxu0 0.0
    %168 = vmatprep.subr.mxu0 0.0
    %169 = vmatpush1.msra.mxu0 0.0
    %170 = vmatprep.subr.mxu0 0.0
    %171 = vmatpush1.msra.mxu0 0.0
    %172 = vmatprep.mubr.f32.mxu0 0.0
    %173 = vmatmul.mubr.f32.gmra.mrb[0].mxu0 %v106
    %v174 = vpop.f32.mrb[0].mxu0
    %v175 = vadd.f32 0.0, %v174
    %v176 = vpop.f32.mrb[0].mxu0
    %177 = vdwg.mxu0
    %178 = vset.pattern.permute.xlu0 2
    %179 = vperm.xlu0 %178, %v12
    %v180 = vpop.permute.xlu0 %179
    %vm181 = vcmp.eq.s32.totalorder %v18, %v180
    %v182 = vsel %vm181, 1, 0
    %v183 = vcvt.s32.f32 %v182
    %v185 = vsel %vm25, %v183, 0
    %187 = vmatprep.subr.mxu0 0.0
    %188 = vmatpush1.msra.mxu0 %v13
    %189 = vmatprep.subr.mxu0 0.0
    %190 = vmatpush1.msra.mxu0 %v14
    %191 = vmatprep.subr.mxu0 0.0
    %192 = vmatpush1.msra.mxu0 %v15
    %193 = vmatprep.subr.mxu0 0.0
    %194 = vmatpush1.msra.mxu0 %v16
    %195 = vmatprep.subr.mxu0 0.0
    %196 = vmatpush1.msra.mxu0 0.0
    %197 = vmatprep.subr.mxu0 0.0
    %198 = vmatpush1.msra.mxu0 0.0
    %199 = vmatprep.subr.mxu0 0.0
    %200 = vmatpush1.msra.mxu0 0.0
    %201 = vmatprep.subr.mxu0 0.0
    %202 = vmatpush1.msra.mxu0 0.0
    %203 = vmatprep.subr.mxu0 0.0
    %204 = vmatpush1.msra.mxu0 0.0
    %205 = vmatprep.subr.mxu0 0.0
    %206 = vmatpush1.msra.mxu0 0.0
    %207 = vmatprep.subr.mxu0 0.0
    %208 = vmatpush1.msra.mxu0 0.0
    %209 = vmatprep.subr.mxu0 0.0
    %210 = vmatpush1.msra.mxu0 0.0
    %211 = vmatprep.subr.mxu0 0.0
    %212 = vmatpush1.msra.mxu0 0.0
    %213 = vmatprep.subr.mxu0 0.0
    %214 = vmatpush1.msra.mxu0 0.0
    %215 = vmatprep.subr.mxu0 0.0
    %216 = vmatpush1.msra.mxu0 0.0
    %217 = vmatprep.subr.mxu0 0.0
    %218 = vmatpush1.msra.mxu0 0.0
    %219 = vmatprep.subr.mxu0 0.0
    %220 = vmatpush1.msra.mxu0 0.0
    %221 = vmatprep.subr.mxu0 0.0
    %222 = vmatpush1.msra.mxu0 0.0
    %223 = vmatprep.subr.mxu0 0.0
    %224 = vmatpush1.msra.mxu0 0.0
    %225 = vmatprep.subr.mxu0 0.0
    %226 = vmatpush1.msra.mxu0 0.0
    %227 = vmatprep.subr.mxu0 0.0
    %228 = vmatpush1.msra.mxu0 0.0
    %229 = vmatprep.subr.mxu0 0.0
    %230 = vmatpush1.msra.mxu0 0.0
    %231 = vmatprep.subr.mxu0 0.0
    %232 = vmatpush1.msra.mxu0 0.0
    %233 = vmatprep.subr.mxu0 0.0
    %234 = vmatpush1.msra.mxu0 0.0
    %235 = vmatprep.subr.mxu0 0.0
    %236 = vmatpush1.msra.mxu0 0.0
    %237 = vmatprep.subr.mxu0 0.0
    %238 = vmatpush1.msra.mxu0 0.0
    %239 = vmatprep.subr.mxu0 0.0
    %240 = vmatpush1.msra.mxu0 0.0
    %241 = vmatprep.subr.mxu0 0.0
    %242 = vmatpush1.msra.mxu0 0.0
    %243 = vmatprep.subr.mxu0 0.0
    %244 = vmatpush1.msra.mxu0 0.0
    %245 = vmatprep.subr.mxu0 0.0
    %246 = vmatpush1.msra.mxu0 0.0
    %247 = vmatprep.subr.mxu0 0.0
    %248 = vmatpush1.msra.mxu0 0.0
    %249 = vmatprep.subr.mxu0 0.0
    %250 = vmatpush1.msra.mxu0 0.0
    %251 = vmatprep.mubr.f32.mxu0 0.0
    %252 = vmatmul.mubr.f32.gmra.mrb[0].mxu0 %v185
    %v253 = vpop.f32.mrb[0].mxu0
    %v254 = vadd.f32 0.0, %v253
    %v255 = vpop.f32.mrb[0].mxu0
    %256 = vdwg.mxu0
    %257 = vset.pattern.permute.xlu0 3
    %258 = vperm.xlu0 %257, %v12
    %v259 = vpop.permute.xlu0 %258
    %vm260 = vcmp.eq.s32.totalorder %v18, %v259
    %v261 = vsel %vm260, 1, 0
    %v262 = vcvt.s32.f32 %v261
    %v264 = vsel %vm25, %v262, 0
    %266 = vmatprep.subr.mxu0 0.0
    %267 = vmatpush1.msra.mxu0 %v13
    %268 = vmatprep.subr.mxu0 0.0
    %269 = vmatpush1.msra.mxu0 %v14
    %270 = vmatprep.subr.mxu0 0.0
    %271 = vmatpush1.msra.mxu0 %v15
    %272 = vmatprep.subr.mxu0 0.0
    %273 = vmatpush1.msra.mxu0 %v16
    %274 = vmatprep.subr.mxu0 0.0
    %275 = vmatpush1.msra.mxu0 0.0
    %276 = vmatprep.subr.mxu0 0.0
    %277 = vmatpush1.msra.mxu0 0.0
    %278 = vmatprep.subr.mxu0 0.0
    %279 = vmatpush1.msra.mxu0 0.0
    %280 = vmatprep.subr.mxu0 0.0
    %281 = vmatpush1.msra.mxu0 0.0
    %282 = vmatprep.subr.mxu0 0.0
    %283 = vmatpush1.msra.mxu0 0.0
    %284 = vmatprep.subr.mxu0 0.0
    %285 = vmatpush1.msra.mxu0 0.0
    %286 = vmatprep.subr.mxu0 0.0
    %287 = vmatpush1.msra.mxu0 0.0
    %288 = vmatprep.subr.mxu0 0.0
    %289 = vmatpush1.msra.mxu0 0.0
    %290 = vmatprep.subr.mxu0 0.0
    %291 = vmatpush1.msra.mxu0 0.0
    %292 = vmatprep.subr.mxu0 0.0
    %293 = vmatpush1.msra.mxu0 0.0
    %294 = vmatprep.subr.mxu0 0.0
    %295 = vmatpush1.msra.mxu0 0.0
    %296 = vmatprep.subr.mxu0 0.0
    %297 = vmatpush1.msra.mxu0 0.0
    %298 = vmatprep.subr.mxu0 0.0
    %299 = vmatpush1.msra.mxu0 0.0
    %300 = vmatprep.subr.mxu0 0.0
    %301 = vmatpush1.msra.mxu0 0.0
    %302 = vmatprep.subr.mxu0 0.0
    %303 = vmatpush1.msra.mxu0 0.0
    %304 = vmatprep.subr.mxu0 0.0
    %305 = vmatpush1.msra.mxu0 0.0
    %306 = vmatprep.subr.mxu0 0.0
    %307 = vmatpush1.msra.mxu0 0.0
    %308 = vmatprep.subr.mxu0 0.0
    %309 = vmatpush1.msra.mxu0 0.0
    %310 = vmatprep.subr.mxu0 0.0
    %311 = vmatpush1.msra.mxu0 0.0
    %312 = vmatprep.subr.mxu0 0.0
    %313 = vmatpush1.msra.mxu0 0.0
    %314 = vmatprep.subr.mxu0 0.0
    %315 = vmatpush1.msra.mxu0 0.0
    %316 = vmatprep.subr.mxu0 0.0
    %317 = vmatpush1.msra.mxu0 0.0
    %318 = vmatprep.subr.mxu0 0.0
    %319 = vmatpush1.msra.mxu0 0.0
    %320 = vmatprep.subr.mxu0 0.0
    %321 = vmatpush1.msra.mxu0 0.0
    %322 = vmatprep.subr.mxu0 0.0
    %323 = vmatpush1.msra.mxu0 0.0
    %324 = vmatprep.subr.mxu0 0.0
    %325 = vmatpush1.msra.mxu0 0.0
    %326 = vmatprep.subr.mxu0 0.0
    %327 = vmatpush1.msra.mxu0 0.0
    %328 = vmatprep.subr.mxu0 0.0
    %329 = vmatpush1.msra.mxu0 0.0
    %330 = vmatprep.mubr.f32.mxu0 0.0
    %331 = vmatmul.mubr.f32.gmra.mrb[0].mxu0 %v264
    %v332 = vpop.f32.mrb[0].mxu0
    %v333 = vadd.f32 0.0, %v332
    %v334 = vpop.f32.mrb[0].mxu0
    %335 = vdwg.mxu0
    %336 = vset.pattern.permute.xlu0 4
    %337 = vperm.xlu0 %336, %v12
    %v338 = vpop.permute.xlu0 %337
    %vm339 = vcmp.eq.s32.totalorder %v18, %v338
    %v340 = vsel %vm339, 1, 0
    %v341 = vcvt.s32.f32 %v340
    %v343 = vsel %vm25, %v341, 0
    %345 = vmatprep.subr.mxu0 0.0
    %346 = vmatpush1.msra.mxu0 %v13
    %347 = vmatprep.subr.mxu0 0.0
    %348 = vmatpush1.msra.mxu0 %v14
    %349 = vmatprep.subr.mxu0 0.0
    %350 = vmatpush1.msra.mxu0 %v15
    %351 = vmatprep.subr.mxu0 0.0
    %352 = vmatpush1.msra.mxu0 %v16
    %353 = vmatprep.subr.mxu0 0.0
    %354 = vmatpush1.msra.mxu0 0.0
    %355 = vmatprep.subr.mxu0 0.0
    %356 = vmatpush1.msra.mxu0 0.0
    %357 = vmatprep.subr.mxu0 0.0
    %358 = vmatpush1.msra.mxu0 0.0
    %359 = vmatprep.subr.mxu0 0.0
    %360 = vmatpush1.msra.mxu0 0.0
    %361 = vmatprep.subr.mxu0 0.0
    %362 = vmatpush1.msra.mxu0 0.0
    %363 = vmatprep.subr.mxu0 0.0
    %364 = vmatpush1.msra.mxu0 0.0
    %365 = vmatprep.subr.mxu0 0.0
    %366 = vmatpush1.msra.mxu0 0.0
    %367 = vmatprep.subr.mxu0 0.0
    %368 = vmatpush1.msra.mxu0 0.0
    %369 = vmatprep.subr.mxu0 0.0
    %370 = vmatpush1.msra.mxu0 0.0
    %371 = vmatprep.subr.mxu0 0.0
    %372 = vmatpush1.msra.mxu0 0.0
    %373 = vmatprep.subr.mxu0 0.0
    %374 = vmatpush1.msra.mxu0 0.0
    %375 = vmatprep.subr.mxu0 0.0
    %376 = vmatpush1.msra.mxu0 0.0
    %377 = vmatprep.subr.mxu0 0.0
    %378 = vmatpush1.msra.mxu0 0.0
    %379 = vmatprep.subr.mxu0 0.0
    %380 = vmatpush1.msra.mxu0 0.0
    %381 = vmatprep.subr.mxu0 0.0
    %382 = vmatpush1.msra.mxu0 0.0
    %383 = vmatprep.subr.mxu0 0.0
    %384 = vmatpush1.msra.mxu0 0.0
    %385 = vmatprep.subr.mxu0 0.0
    %386 = vmatpush1.msra.mxu0 0.0
    %387 = vmatprep.subr.mxu0 0.0
    %388 = vmatpush1.msra.mxu0 0.0
    %389 = vmatprep.subr.mxu0 0.0
    %390 = vmatpush1.msra.mxu0 0.0
    %391 = vmatprep.subr.mxu0 0.0
    %392 = vmatpush1.msra.mxu0 0.0
    %393 = vmatprep.subr.mxu0 0.0
    %394 = vmatpush1.msra.mxu0 0.0
    %395 = vmatprep.subr.mxu0 0.0
    %396 = vmatpush1.msra.mxu0 0.0
    %397 = vmatprep.subr.mxu0 0.0
    %398 = vmatpush1.msra.mxu0 0.0
    %399 = vmatprep.subr.mxu0 0.0
    %400 = vmatpush1.msra.mxu0 0.0
    %401 = vmatprep.subr.mxu0 0.0
    %402 = vmatpush1.msra.mxu0 0.0
    %403 = vmatprep.subr.mxu0 0.0
    %404 = vmatpush1.msra.mxu0 0.0
    %405 = vmatprep.subr.mxu0 0.0
    %406 = vmatpush1.msra.mxu0 0.0
    %407 = vmatprep.subr.mxu0 0.0
    %408 = vmatpush1.msra.mxu0 0.0
    %409 = vmatprep.mubr.f32.mxu0 0.0
    %410 = vmatmul.mubr.f32.gmra.mrb[0].mxu0 %v343
    %v411 = vpop.f32.mrb[0].mxu0
    %v412 = vadd.f32 0.0, %v411
    %v413 = vpop.f32.mrb[0].mxu0
    %414 = vdwg.mxu0
    %415 = vset.pattern.permute.xlu0 5
    %416 = vperm.xlu0 %415, %v12
    %v417 = vpop.permute.xlu0 %416
    %vm418 = vcmp.eq.s32.totalorder %v18, %v417
    %v419 = vsel %vm418, 1, 0
    %v420 = vcvt.s32.f32 %v419
    %v422 = vsel %vm25, %v420, 0
    %424 = vmatprep.subr.mxu0 0.0
    %425 = vmatpush1.msra.mxu0 %v13
    %426 = vmatprep.subr.mxu0 0.0
    %427 = vmatpush1.msra.mxu0 %v14
    %428 = vmatprep.subr.mxu0 0.0
    %429 = vmatpush1.msra.mxu0 %v15
    %430 = vmatprep.subr.mxu0 0.0
    %431 = vmatpush1.msra.mxu0 %v16
    %432 = vmatprep.subr.mxu0 0.0
    %433 = vmatpush1.msra.mxu0 0.0
    %434 = vmatprep.subr.mxu0 0.0
    %435 = vmatpush1.msra.mxu0 0.0
    %436 = vmatprep.subr.mxu0 0.0
    %437 = vmatpush1.msra.mxu0 0.0
    %438 = vmatprep.subr.mxu0 0.0
    %439 = vmatpush1.msra.mxu0 0.0
    %440 = vmatprep.subr.mxu0 0.0
    %441 = vmatpush1.msra.mxu0 0.0
    %442 = vmatprep.subr.mxu0 0.0
    %443 = vmatpush1.msra.mxu0 0.0
    %444 = vmatprep.subr.mxu0 0.0
    %445 = vmatpush1.msra.mxu0 0.0
    %446 = vmatprep.subr.mxu0 0.0
    %447 = vmatpush1.msra.mxu0 0.0
    %448 = vmatprep.subr.mxu0 0.0
    %449 = vmatpush1.msra.mxu0 0.0
    %450 = vmatprep.subr.mxu0 0.0
    %451 = vmatpush1.msra.mxu0 0.0
    %452 = vmatprep.subr.mxu0 0.0
    %453 = vmatpush1.msra.mxu0 0.0
    %454 = vmatprep.subr.mxu0 0.0
    %455 = vmatpush1.msra.mxu0 0.0
    %456 = vmatprep.subr.mxu0 0.0
    %457 = vmatpush1.msra.mxu0 0.0
    %458 = vmatprep.subr.mxu0 0.0
    %459 = vmatpush1.msra.mxu0 0.0
    %460 = vmatprep.subr.mxu0 0.0
    %461 = vmatpush1.msra.mxu0 0.0
    %462 = vmatprep.subr.mxu0 0.0
    %463 = vmatpush1.msra.mxu0 0.0
    %464 = vmatprep.subr.mxu0 0.0
    %465 = vmatpush1.msra.mxu0 0.0
    %466 = vmatprep.subr.mxu0 0.0
    %467 = vmatpush1.msra.mxu0 0.0
    %468 = vmatprep.subr.mxu0 0.0
    %469 = vmatpush1.msra.mxu0 0.0
    %470 = vmatprep.subr.mxu0 0.0
    %471 = vmatpush1.msra.mxu0 0.0
    %472 = vmatprep.subr.mxu0 0.0
    %473 = vmatpush1.msra.mxu0 0.0
    %474 = vmatprep.subr.mxu0 0.0
    %475 = vmatpush1.msra.mxu0 0.0
    %476 = vmatprep.subr.mxu0 0.0
    %477 = vmatpush1.msra.mxu0 0.0
    %478 = vmatprep.subr.mxu0 0.0
    %479 = vmatpush1.msra.mxu0 0.0
    %480 = vmatprep.subr.mxu0 0.0
    %481 = vmatpush1.msra.mxu0 0.0
    %482 = vmatprep.subr.mxu0 0.0
    %483 = vmatpush1.msra.mxu0 0.0
    %484 = vmatprep.subr.mxu0 0.0
    %485 = vmatpush1.msra.mxu0 0.0
    %486 = vmatprep.subr.mxu0 0.0
    %487 = vmatpush1.msra.mxu0 0.0
    %488 = vmatprep.mubr.f32.mxu0 0.0
    %489 = vmatmul.mubr.f32.gmra.mrb[0].mxu0 %v422
    %v490 = vpop.f32.mrb[0].mxu0
    %v491 = vadd.f32 0.0, %v490
    %v492 = vpop.f32.mrb[0].mxu0
    %493 = vdwg.mxu0
    %494 = vset.pattern.permute.xlu0 6
    %495 = vperm.xlu0 %494, %v12
    %v496 = vpop.permute.xlu0 %495
    %vm497 = vcmp.eq.s32.totalorder %v18, %v496
    %v498 = vsel %vm497, 1, 0
    %v499 = vcvt.s32.f32 %v498
    %v501 = vsel %vm25, %v499, 0
    %503 = vmatprep.subr.mxu0 0.0
    %504 = vmatpush1.msra.mxu0 %v13
    %505 = vmatprep.subr.mxu0 0.0
    %506 = vmatpush1.msra.mxu0 %v14
    %507 = vmatprep.subr.mxu0 0.0
    %508 = vmatpush1.msra.mxu0 %v15
    %509 = vmatprep.subr.mxu0 0.0
    %510 = vmatpush1.msra.mxu0 %v16
    %511 = vmatprep.subr.mxu0 0.0
    %512 = vmatpush1.msra.mxu0 0.0
    %513 = vmatprep.subr.mxu0 0.0
    %514 = vmatpush1.msra.mxu0 0.0
    %515 = vmatprep.subr.mxu0 0.0
    %516 = vmatpush1.msra.mxu0 0.0
    %517 = vmatprep.subr.mxu0 0.0
    %518 = vmatpush1.msra.mxu0 0.0
    %519 = vmatprep.subr.mxu0 0.0
    %520 = vmatpush1.msra.mxu0 0.0
    %521 = vmatprep.subr.mxu0 0.0
    %522 = vmatpush1.msra.mxu0 0.0
    %523 = vmatprep.subr.mxu0 0.0
    %524 = vmatpush1.msra.mxu0 0.0
    %525 = vmatprep.subr.mxu0 0.0
    %526 = vmatpush1.msra.mxu0 0.0
    %527 = vmatprep.subr.mxu0 0.0
    %528 = vmatpush1.msra.mxu0 0.0
    %529 = vmatprep.subr.mxu0 0.0
    %530 = vmatpush1.msra.mxu0 0.0
    %531 = vmatprep.subr.mxu0 0.0
    %532 = vmatpush1.msra.mxu0 0.0
    %533 = vmatprep.subr.mxu0 0.0
    %534 = vmatpush1.msra.mxu0 0.0
    %535 = vmatprep.subr.mxu0 0.0
    %536 = vmatpush1.msra.mxu0 0.0
    %537 = vmatprep.subr.mxu0 0.0
    %538 = vmatpush1.msra.mxu0 0.0
    %539 = vmatprep.subr.mxu0 0.0
    %540 = vmatpush1.msra.mxu0 0.0
    %541 = vmatprep.subr.mxu0 0.0
    %542 = vmatpush1.msra.mxu0 0.0
    %543 = vmatprep.subr.mxu0 0.0
    %544 = vmatpush1.msra.mxu0 0.0
    %545 = vmatprep.subr.mxu0 0.0
    %546 = vmatpush1.msra.mxu0 0.0
    %547 = vmatprep.subr.mxu0 0.0
    %548 = vmatpush1.msra.mxu0 0.0
    %549 = vmatprep.subr.mxu0 0.0
    %550 = vmatpush1.msra.mxu0 0.0
    %551 = vmatprep.subr.mxu0 0.0
    %552 = vmatpush1.msra.mxu0 0.0
    %553 = vmatprep.subr.mxu0 0.0
    %554 = vmatpush1.msra.mxu0 0.0
    %555 = vmatprep.subr.mxu0 0.0
    %556 = vmatpush1.msra.mxu0 0.0
    %557 = vmatprep.subr.mxu0 0.0
    %558 = vmatpush1.msra.mxu0 0.0
    %559 = vmatprep.subr.mxu0 0.0
    %560 = vmatpush1.msra.mxu0 0.0
    %561 = vmatprep.subr.mxu0 0.0
    %562 = vmatpush1.msra.mxu0 0.0
    %563 = vmatprep.subr.mxu0 0.0
    %564 = vmatpush1.msra.mxu0 0.0
    %565 = vmatprep.subr.mxu0 0.0
    %566 = vmatpush1.msra.mxu0 0.0
    %567 = vmatprep.mubr.f32.mxu0 0.0
    %568 = vmatmul.mubr.f32.gmra.mrb[0].mxu0 %v501
    %v569 = vpop.f32.mrb[0].mxu0
    %v570 = vadd.f32 0.0, %v569
    %v571 = vpop.f32.mrb[0].mxu0
    %572 = vdwg.mxu0
    %573 = vset.pattern.permute.xlu0 7
    %574 = vperm.xlu0 %573, %v12
    %v575 = vpop.permute.xlu0 %574
    %vm576 = vcmp.eq.s32.totalorder %v18, %v575
    %v577 = vsel %vm576, 1, 0
    %v578 = vcvt.s32.f32 %v577
    %v580 = vsel %vm25, %v578, 0
    %582 = vmatprep.subr.mxu0 0.0
    %583 = vmatpush1.msra.mxu0 %v13
    %584 = vmatprep.subr.mxu0 0.0
    %585 = vmatpush1.msra.mxu0 %v14
    %586 = vmatprep.subr.mxu0 0.0
    %587 = vmatpush1.msra.mxu0 %v15
    %588 = vmatprep.subr.mxu0 0.0
    %589 = vmatpush1.msra.mxu0 %v16
    %590 = vmatprep.subr.mxu0 0.0
    %591 = vmatpush1.msra.mxu0 0.0
    %592 = vmatprep.subr.mxu0 0.0
    %593 = vmatpush1.msra.mxu0 0.0
    %594 = vmatprep.subr.mxu0 0.0
    %595 = vmatpush1.msra.mxu0 0.0
    %596 = vmatprep.subr.mxu0 0.0
    %597 = vmatpush1.msra.mxu0 0.0
    %598 = vmatprep.subr.mxu0 0.0
    %599 = vmatpush1.msra.mxu0 0.0
    %600 = vmatprep.subr.mxu0 0.0
    %601 = vmatpush1.msra.mxu0 0.0
    %602 = vmatprep.subr.mxu0 0.0
    %603 = vmatpush1.msra.mxu0 0.0
    %604 = vmatprep.subr.mxu0 0.0
    %605 = vmatpush1.msra.mxu0 0.0
    %606 = vmatprep.subr.mxu0 0.0
    %607 = vmatpush1.msra.mxu0 0.0
    %608 = vmatprep.subr.mxu0 0.0
    %609 = vmatpush1.msra.mxu0 0.0
    %610 = vmatprep.subr.mxu0 0.0
    %611 = vmatpush1.msra.mxu0 0.0
    %612 = vmatprep.subr.mxu0 0.0
    %613 = vmatpush1.msra.mxu0 0.0
    %614 = vmatprep.subr.mxu0 0.0
    %615 = vmatpush1.msra.mxu0 0.0
    %616 = vmatprep.subr.mxu0 0.0
    %617 = vmatpush1.msra.mxu0 0.0
    %618 = vmatprep.subr.mxu0 0.0
    %619 = vmatpush1.msra.mxu0 0.0
    %620 = vmatprep.subr.mxu0 0.0
    %621 = vmatpush1.msra.mxu0 0.0
    %622 = vmatprep.subr.mxu0 0.0
    %623 = vmatpush1.msra.mxu0 0.0
    %624 = vmatprep.subr.mxu0 0.0
    %625 = vmatpush1.msra.mxu0 0.0
    %626 = vmatprep.subr.mxu0 0.0
    %627 = vmatpush1.msra.mxu0 0.0
    %628 = vmatprep.subr.mxu0 0.0
    %629 = vmatpush1.msra.mxu0 0.0
    %630 = vmatprep.subr.mxu0 0.0
    %631 = vmatpush1.msra.mxu0 0.0
    %632 = vmatprep.subr.mxu0 0.0
    %633 = vmatpush1.msra.mxu0 0.0
    %634 = vmatprep.subr.mxu0 0.0
    %635 = vmatpush1.msra.mxu0 0.0
    %636 = vmatprep.subr.mxu0 0.0
    %637 = vmatpush1.msra.mxu0 0.0
    %638 = vmatprep.subr.mxu0 0.0
    %639 = vmatpush1.msra.mxu0 0.0
    %640 = vmatprep.subr.mxu0 0.0
    %641 = vmatpush1.msra.mxu0 0.0
    %642 = vmatprep.subr.mxu0 0.0
    %643 = vmatpush1.msra.mxu0 0.0
    %644 = vmatprep.subr.mxu0 0.0
    %645 = vmatpush1.msra.mxu0 0.0
    %646 = vmatprep.mubr.f32.mxu0 0.0
    %647 = vmatmul.mubr.f32.gmra.mrb[0].mxu0 %v580
    %v648 = vpop.f32.mrb[0].mxu0
    %v649 = vadd.f32 0.0, %v648
    %v650 = vpop.f32.mrb[0].mxu0
    %651 = vdwg.mxu0
    %653 = vrot.lane.b32.xlu0 %v175, 16
    %v654 = vpop.permute.xlu0 %653
    %657 = vrot.lane.b32.xlu0 %v254, 32
    %v658 = vpop.permute.xlu0 %657
    %661 = vrot.lane.b32.xlu0 %v333, 48
    %v662 = vpop.permute.xlu0 %661
    %665 = vrot.lane.b32.xlu0 %v412, 64
    %v666 = vpop.permute.xlu0 %665
    %669 = vrot.lane.b32.xlu0 %v491, 80
    %v670 = vpop.permute.xlu0 %669
    %673 = vrot.lane.b32.xlu0 %v570, 96
    %v674 = vpop.permute.xlu0 %673
    %677 = vrot.lane.b32.xlu0 %v649, 112
    %v678 = vpop.permute.xlu0 %677
    %vm680 = vcmask 130048
    %v681 = vsel %vm680, %v96, %v654
    %v682 = vsel %vm25, %v681, %v658
    %vm683 = vcmask 392192
    %v684 = vsel %vm683, %v682, %v662
    %vm685 = vcmask 523264
    %v686 = vsel %vm685, %v684, %v666
    %vm687 = vcmask 654336
    %v688 = vsel %vm687, %v686, %v670
    %vm689 = vcmask 785408
    %v690 = vsel %vm689, %v688, %v674
    %vm691 = vcmask 916480
    %v692 = vsel %vm691, %v690, %v678
    %693 = vst [vmem:[#allocation2] sm:$0xff] %v692
    // Predicated region
    $region10: #{tpu_custom_call.1} parent=1 // pred_check
      _
    $region11: #{tpu_custom_call.1} parent=1 // pred_check_branch
      %695 = sbr.rel (0) target = $region13
    $region12: #{tpu_custom_call.1} parent=1 // pred_region
      %s697 = ssub.s32 128, 128
      %698 = vsyncadd [#allocation3], %s697
      %s700 = sshll.u32 [#allocation2], 4
      %s701 = int_to_ptr.vmem [resolvable:$true] %s700
      %703 = dma.vmem_to_hbm [thread:$0]  %s701, 128, %s2, [#allocation3]
    $region13: #{tpu_custom_call.1} parent=1 // pred_fallthru
      _
    // Predicated region
    $region14: #{tpu_custom_call.1} parent=1 // pred_check
      _
    $region15: #{tpu_custom_call.1} parent=1 // pred_check_branch
      %705 = sbr.rel (0) target = $region17
    $region16: #{tpu_custom_call.1} parent=1 // pred_region
      %706 = dma.done [#allocation3], 128
    $region17: #{tpu_custom_call.1} parent=1 // pred_fallthru
      _
    %707 = vsyncpa [#allocation3], 1

</llo_original>
